<compile_context>
chip_gen: v7x
topology: tpu7x:2x2x1
jax: 0.10.0
libtpu: 0.0.40
codegen_flags: <defaults>
</compile_context>

<pallas_src>
import functools

import jax
import jax.numpy as jnp
import numpy as np
from jax.experimental import pallas as pl
from jax.experimental.pallas import tpu as pltpu


def _lstm_kernel(tok_ref, emb_ref, wih_ref, whh_ref, b_ref, wfc_ref, bfc_ref,
                 out_ref, x_scr, *, seq_len, batch, hidden):
    """Whole LSTM_1 forward in a single invocation.

    tok_ref : (B, T)     int32 token ids, SMEM (scalar reads drive the gather)
    emb_ref : (V, E)     embedding table, VMEM
    wih_ref : (E, 4H)    input->gates weights (transposed from PyTorch (4H, E))
    whh_ref : (H, 4H)    hidden->gates weights (transposed)
    b_ref   : (1, 4H)    b_ih + b_hh
    wfc_ref : (H, Cp)    final linear weights, zero-padded to 128 output lanes
    bfc_ref : (1, Cp)    final linear bias, zero-padded
    out_ref : (B, Cp)    lane-dense logits (valid in lanes [0, C))
    x_scr   : (T*B, E)   VMEM scratch for the in-kernel embedding gather
    """
    B, T, H = batch, seq_len, hidden
    G = 4 * H

    # ---- In-kernel embedding lookup, time-major (row k = t*B + b) -----------
    # T*B tiny dynamic-row copies, all off the recurrent critical path.
    for t in range(T):
        for b in range(B):
            tok = tok_ref[b, t]
            x_scr[pl.ds(t * B + b, 1), :] = emb_ref[pl.ds(tok, 1), :]

    # ---- Hoisted input projection for ALL timesteps (one fat MXU matmul) ----
    # (T*B, E) @ (E, 4H) + bias; kept as a value in vregs, not VMEM scratch.
    xp = (jnp.dot(x_scr[...], wih_ref[...], preferred_element_type=jnp.float32)
          + b_ref[...])                                           # (T*B, 4H)

    # TODO(synk): hold w_hh in MXU weight registers across the recurrence via
    # pltpu.matmul_push_rhs / matmul_acc_lhs / matmul_pop to avoid re-pushing
    # the same (32, 128) RHS every step.
    whh = whh_ref[...]                                            # (H, 4H)

    # Hoisted lane constants (JAX does not CSE broadcast_in_dim).
    lane = jax.lax.broadcasted_iota(jnp.int32, (B, G), 1)
    g_mask = (lane >= 2 * H) & (lane < 3 * H)                     # tanh ('g') block
    pre = jnp.where(g_mask, jnp.float32(1.0), jnp.float32(0.5))   # x/2 on sigmoid lanes
    half = jnp.float32(0.5)

    h = jnp.zeros((B, H), jnp.float32)
    c = jnp.zeros((B, H), jnp.float32)

    # T is small and static: fully-unrolled straight-line recurrence (no grid /
    # per-step DMA / pipeline overhead; LLO scheduler sees everything).
    for t in range(T):
        gates = xp[t * B:(t + 1) * B, :] + jnp.dot(
            h, whh, preferred_element_type=jnp.float32)           # (B, 4H)

        # Single EUP pass: one tanh over the whole 128-lane gates tile; sigmoid
        # lanes recovered as sigmoid(x) = 0.5 * tanh(x / 2) + 0.5 (VPU fixup).
        t_all = jnp.tanh(gates * pre)
        act = jnp.where(g_mask, t_all, half * t_all + half)       # [i', f', g', o']

        i_g = act[:, 0 * H:1 * H]
        f_g = act[:, 1 * H:2 * H]
        g_g = act[:, 2 * H:3 * H]
        o_g = act[:, 3 * H:4 * H]

        c = f_g * c + i_g * g_g
        h = o_g * jnp.tanh(c)

    # ---- Final linear on h_T, lane-dense padded (B, 128) output -------------
    out_ref[...] = (
        jnp.dot(h, wfc_ref[...], preferred_element_type=jnp.float32)
        + bfc_ref[...])


def prepare_params(emb_table, w_ih, w_hh, b_ih, b_hh, w_fc, b_fc):
    """One-time (model-load) weight layout prep — kept off the per-call path."""
    H = w_hh.shape[1]
    C = w_fc.shape[0]
    C_pad = ((C + 127) // 128) * 128                              # lane-dense FC width
    emb = emb_table.astype(jnp.float32)                           # (V, E)
    wih_t = jnp.transpose(w_ih).astype(jnp.float32)               # (E, 4H)
    whh_t = jnp.transpose(w_hh).astype(jnp.float32)               # (H, 4H)
    bias = (b_ih + b_hh).reshape(1, 4 * H).astype(jnp.float32)    # (1, 4H)
    wfc_pad = jnp.zeros((H, C_pad), jnp.float32).at[:, :C].set(
        jnp.transpose(w_fc).astype(jnp.float32))                  # (H, C_pad)
    bfc_pad = jnp.zeros((1, C_pad), jnp.float32).at[:, :C].set(
        b_fc.astype(jnp.float32))                                 # (1, C_pad)
    params = (emb, wih_t, whh_t, bias, wfc_pad, bfc_pad)
    return jax.tree_util.tree_map(jnp.asarray, params)


@jax.jit
def lstm1_forward(x_tokens, emb, wih_t, whh_t, bias, wfc_pad, bfc_pad):
    """Single-pallas_call forward.

    Returns lane-dense (B, C_pad) logits; valid classes live in lanes [0, C).
    """
    B, T = x_tokens.shape
    E = emb.shape[1]
    H = whh_t.shape[0]
    C_pad = wfc_pad.shape[1]

    kernel = functools.partial(_lstm_kernel, seq_len=T, batch=B, hidden=H)
    vmem = lambda: pl.BlockSpec(memory_space=pltpu.MemorySpace.VMEM)

    # TODO(synk): at larger batch on v7x, add a leading grid axis of size 2 with
    # dimension_semantics=("parallel",) to split batch across the two
    # TensorCores; at B=2 the split is pure overhead.
    # TODO(synk): if T*B*4H scales up, chunk the hoisted projection over T
    # (pltpu.emit_pipeline / pl.Buffered(2)) to respect v7x's 64 MiB VMEM, and
    # switch the matmul operands to bf16 (keep f32 accumulate / elementwise).
    return pl.pallas_call(
        kernel,
        out_shape=jax.ShapeDtypeStruct((B, C_pad), jnp.float32),
        in_specs=[pl.BlockSpec(memory_space=pltpu.MemorySpace.SMEM)]   # tokens
                 + [vmem() for _ in range(6)],
        out_specs=vmem(),
        scratch_shapes=[pltpu.VMEM((T * B, E), jnp.float32)],          # gathered x
    )(x_tokens, emb, wih_t, whh_t, bias, wfc_pad, bfc_pad)


def lstm1_reference(x_tokens, emb_table, w_ih, w_hh, b_ih, b_hh, w_fc, b_fc):
    """Pure-JAX reference mirroring PyTorch nn.LSTM semantics."""
    B, T = x_tokens.shape
    H = w_hh.shape[1]
    x_emb = jnp.take(emb_table, x_tokens, axis=0)  # (B, T, E)
    h = jnp.zeros((B, H), jnp.float32)
    c = jnp.zeros((B, H), jnp.float32)
    for t in range(T):
        gates = x_emb[:, t] @ w_ih.T + b_ih + h @ w_hh.T + b_hh
        i_g = jax.nn.sigmoid(gates[:, 0 * H:1 * H])
        f_g = jax.nn.sigmoid(gates[:, 1 * H:2 * H])
        g_g = jnp.tanh(gates[:, 2 * H:3 * H])
        o_g = jax.nn.sigmoid(gates[:, 3 * H:4 * H])
        c = f_g * c + i_g * g_g
        h = o_g * jnp.tanh(c)
    return h @ w_fc.T + b_fc


if __name__ == "__main__":
    # Small shapes consistent with the module's forward.
    vocab_size, embed_dim, num_class, hidden = 16, 32, 8, 32
    B, T = 2, 8
    padding_index = 0

    key = jax.random.PRNGKey(0)
    k_emb, k_ih, k_hh, k_bih, k_bhh, k_fc, k_bfc, k_x = jax.random.split(key, 8)

    scale = 0.1
    emb_table = scale * jax.random.normal(k_emb, (vocab_size, embed_dim), jnp.float32)
    emb_table = emb_table.at[padding_index].set(0.0)  # padding_idx=0 row zeroed

    w_ih = scale * jax.random.normal(k_ih, (4 * hidden, embed_dim), jnp.float32)
    w_hh = scale * jax.random.normal(k_hh, (4 * hidden, hidden), jnp.float32)
    b_ih = scale * jax.random.normal(k_bih, (4 * hidden,), jnp.float32)
    b_hh = scale * jax.random.normal(k_bhh, (4 * hidden,), jnp.float32)
    w_fc = scale * jax.random.normal(k_fc, (num_class, hidden), jnp.float32)
    b_fc = scale * jax.random.normal(k_bfc, (num_class,), jnp.float32)

    x_tokens = jax.random.randint(k_x, (B, T), 0, vocab_size, dtype=jnp.int32)

    # One-time layout prep (model load), then a single-pallas_call forward.
    params = prepare_params(emb_table, w_ih, w_hh, b_ih, b_hh, w_fc, b_fc)
    out_padded = lstm1_forward(x_tokens, *params)
    out_padded = jax.block_until_ready(out_padded)
    out = out_padded[:, :num_class]                    # consumer-side slice

    ref = lstm1_reference(x_tokens, emb_table, w_ih, w_hh, b_ih, b_hh, w_fc, b_fc)
    if not np.allclose(np.asarray(out), np.asarray(ref), atol=1e-5, rtol=1e-5):
        raise AssertionError("Pallas LSTM output mismatch vs reference")

    print("KERNEL_OK")
</pallas_src>

<mosaic_0001>
module attributes {stable_mosaic.version = 11 : i64} {
  func.func @_lstm_kernel(%arg0: memref<2x8xi32, #tpu.memory_space<smem>>, %arg1: memref<16x32xf32, #tpu.memory_space<vmem>>, %arg2: memref<32x128xf32, #tpu.memory_space<vmem>>, %arg3: memref<32x128xf32, #tpu.memory_space<vmem>>, %arg4: memref<1x128xf32, #tpu.memory_space<vmem>>, %arg5: memref<32x128xf32, #tpu.memory_space<vmem>>, %arg6: memref<1x128xf32, #tpu.memory_space<vmem>>, %arg7: memref<2x128xf32, #tpu.memory_space<vmem>>, %arg8: memref<16x32xf32, #tpu.memory_space<vmem>>) attributes {dimension_semantics = [], scalar_prefetch = 0 : i64, scratch_operands = 1 : i64, tpu.core_type = #tpu.core_type<tc>} {
    %c0 = arith.constant 0 : index
    %c0_0 = arith.constant 0 : index
    %0 = memref.load %arg0[%c0, %c0_0] : memref<2x8xi32, #tpu.memory_space<smem>>
    %1 = arith.index_cast %0 : i32 to index
    %c0_1 = arith.constant 0 : index
    %2 = vector.load %arg1[%1, %c0_1] : memref<16x32xf32, #tpu.memory_space<vmem>>, vector<1x32xf32>
    %c0_2 = arith.constant 0 : index
    %c0_3 = arith.constant 0 : index
    %3 = vector.load %arg8[%c0_2, %c0_3] : memref<16x32xf32, #tpu.memory_space<vmem>>, vector<1x32xf32>
    tpu.vector_store %arg8[%c0_2, %c0_3], %2 {strides = array<i32>} : memref<16x32xf32, #tpu.memory_space<vmem>>, vector<1x32xf32>,
    %c1 = arith.constant 1 : index
    %c0_4 = arith.constant 0 : index
    %4 = memref.load %arg0[%c1, %c0_4] : memref<2x8xi32, #tpu.memory_space<smem>>
    %5 = arith.index_cast %4 : i32 to index
    %c0_5 = arith.constant 0 : index
    %6 = vector.load %arg1[%5, %c0_5] : memref<16x32xf32, #tpu.memory_space<vmem>>, vector<1x32xf32>
    %c1_6 = arith.constant 1 : index
    %c0_7 = arith.constant 0 : index
    %7 = vector.load %arg8[%c1_6, %c0_7] : memref<16x32xf32, #tpu.memory_space<vmem>>, vector<1x32xf32>
    tpu.vector_store %arg8[%c1_6, %c0_7], %6 {strides = array<i32>} : memref<16x32xf32, #tpu.memory_space<vmem>>, vector<1x32xf32>,
    %c0_8 = arith.constant 0 : index
    %c1_9 = arith.constant 1 : index
    %8 = memref.load %arg0[%c0_8, %c1_9] : memref<2x8xi32, #tpu.memory_space<smem>>
    %9 = arith.index_cast %8 : i32 to index
    %c0_10 = arith.constant 0 : index
    %10 = vector.load %arg1[%9, %c0_10] : memref<16x32xf32, #tpu.memory_space<vmem>>, vector<1x32xf32>
    %c2 = arith.constant 2 : index
    %c0_11 = arith.constant 0 : index
    %11 = vector.load %arg8[%c2, %c0_11] : memref<16x32xf32, #tpu.memory_space<vmem>>, vector<1x32xf32>
    tpu.vector_store %arg8[%c2, %c0_11], %10 {strides = array<i32>} : memref<16x32xf32, #tpu.memory_space<vmem>>, vector<1x32xf32>,
    %c1_12 = arith.constant 1 : index
    %c1_13 = arith.constant 1 : index
    %12 = memref.load %arg0[%c1_12, %c1_13] : memref<2x8xi32, #tpu.memory_space<smem>>
    %13 = arith.index_cast %12 : i32 to index
    %c0_14 = arith.constant 0 : index
    %14 = vector.load %arg1[%13, %c0_14] : memref<16x32xf32, #tpu.memory_space<vmem>>, vector<1x32xf32>
    %c3 = arith.constant 3 : index
    %c0_15 = arith.constant 0 : index
    %15 = vector.load %arg8[%c3, %c0_15] : memref<16x32xf32, #tpu.memory_space<vmem>>, vector<1x32xf32>
    tpu.vector_store %arg8[%c3, %c0_15], %14 {strides = array<i32>} : memref<16x32xf32, #tpu.memory_space<vmem>>, vector<1x32xf32>,
    %c0_16 = arith.constant 0 : index
    %c2_17 = arith.constant 2 : index
    %16 = memref.load %arg0[%c0_16, %c2_17] : memref<2x8xi32, #tpu.memory_space<smem>>
    %17 = arith.index_cast %16 : i32 to index
    %c0_18 = arith.constant 0 : index
    %18 = vector.load %arg1[%17, %c0_18] : memref<16x32xf32, #tpu.memory_space<vmem>>, vector<1x32xf32>
    %c4 = arith.constant 4 : index
    %c0_19 = arith.constant 0 : index
    %19 = vector.load %arg8[%c4, %c0_19] : memref<16x32xf32, #tpu.memory_space<vmem>>, vector<1x32xf32>
    tpu.vector_store %arg8[%c4, %c0_19], %18 {strides = array<i32>} : memref<16x32xf32, #tpu.memory_space<vmem>>, vector<1x32xf32>,
    %c1_20 = arith.constant 1 : index
    %c2_21 = arith.constant 2 : index
    %20 = memref.load %arg0[%c1_20, %c2_21] : memref<2x8xi32, #tpu.memory_space<smem>>
    %21 = arith.index_cast %20 : i32 to index
    %c0_22 = arith.constant 0 : index
    %22 = vector.load %arg1[%21, %c0_22] : memref<16x32xf32, #tpu.memory_space<vmem>>, vector<1x32xf32>
    %c5 = arith.constant 5 : index
    %c0_23 = arith.constant 0 : index
    %23 = vector.load %arg8[%c5, %c0_23] : memref<16x32xf32, #tpu.memory_space<vmem>>, vector<1x32xf32>
    tpu.vector_store %arg8[%c5, %c0_23], %22 {strides = array<i32>} : memref<16x32xf32, #tpu.memory_space<vmem>>, vector<1x32xf32>,
    %c0_24 = arith.constant 0 : index
    %c3_25 = arith.constant 3 : index
    %24 = memref.load %arg0[%c0_24, %c3_25] : memref<2x8xi32, #tpu.memory_space<smem>>
    %25 = arith.index_cast %24 : i32 to index
    %c0_26 = arith.constant 0 : index
    %26 = vector.load %arg1[%25, %c0_26] : memref<16x32xf32, #tpu.memory_space<vmem>>, vector<1x32xf32>
    %c6 = arith.constant 6 : index
    %c0_27 = arith.constant 0 : index
    %27 = vector.load %arg8[%c6, %c0_27] : memref<16x32xf32, #tpu.memory_space<vmem>>, vector<1x32xf32>
    tpu.vector_store %arg8[%c6, %c0_27], %26 {strides = array<i32>} : memref<16x32xf32, #tpu.memory_space<vmem>>, vector<1x32xf32>,
    %c1_28 = arith.constant 1 : index
    %c3_29 = arith.constant 3 : index
    %28 = memref.load %arg0[%c1_28, %c3_29] : memref<2x8xi32, #tpu.memory_space<smem>>
    %29 = arith.index_cast %28 : i32 to index
    %c0_30 = arith.constant 0 : index
    %30 = vector.load %arg1[%29, %c0_30] : memref<16x32xf32, #tpu.memory_space<vmem>>, vector<1x32xf32>
    %c7 = arith.constant 7 : index
    %c0_31 = arith.constant 0 : index
    %31 = vector.load %arg8[%c7, %c0_31] : memref<16x32xf32, #tpu.memory_space<vmem>>, vector<1x32xf32>
    tpu.vector_store %arg8[%c7, %c0_31], %30 {strides = array<i32>} : memref<16x32xf32, #tpu.memory_space<vmem>>, vector<1x32xf32>,
    %c0_32 = arith.constant 0 : index
    %c4_33 = arith.constant 4 : index
    %32 = memref.load %arg0[%c0_32, %c4_33] : memref<2x8xi32, #tpu.memory_space<smem>>
    %33 = arith.index_cast %32 : i32 to index
    %c0_34 = arith.constant 0 : index
    %34 = vector.load %arg1[%33, %c0_34] : memref<16x32xf32, #tpu.memory_space<vmem>>, vector<1x32xf32>
    %c8 = arith.constant 8 : index
    %c0_35 = arith.constant 0 : index
    %35 = vector.load %arg8[%c8, %c0_35] : memref<16x32xf32, #tpu.memory_space<vmem>>, vector<1x32xf32>
    tpu.vector_store %arg8[%c8, %c0_35], %34 {strides = array<i32>} : memref<16x32xf32, #tpu.memory_space<vmem>>, vector<1x32xf32>,
    %c1_36 = arith.constant 1 : index
    %c4_37 = arith.constant 4 : index
    %36 = memref.load %arg0[%c1_36, %c4_37] : memref<2x8xi32, #tpu.memory_space<smem>>
    %37 = arith.index_cast %36 : i32 to index
    %c0_38 = arith.constant 0 : index
    %38 = vector.load %arg1[%37, %c0_38] : memref<16x32xf32, #tpu.memory_space<vmem>>, vector<1x32xf32>
    %c9 = arith.constant 9 : index
    %c0_39 = arith.constant 0 : index
    %39 = vector.load %arg8[%c9, %c0_39] : memref<16x32xf32, #tpu.memory_space<vmem>>, vector<1x32xf32>
    tpu.vector_store %arg8[%c9, %c0_39], %38 {strides = array<i32>} : memref<16x32xf32, #tpu.memory_space<vmem>>, vector<1x32xf32>,
    %c0_40 = arith.constant 0 : index
    %c5_41 = arith.constant 5 : index
    %40 = memref.load %arg0[%c0_40, %c5_41] : memref<2x8xi32, #tpu.memory_space<smem>>
    %41 = arith.index_cast %40 : i32 to index
    %c0_42 = arith.constant 0 : index
    %42 = vector.load %arg1[%41, %c0_42] : memref<16x32xf32, #tpu.memory_space<vmem>>, vector<1x32xf32>
    %c10 = arith.constant 10 : index
    %c0_43 = arith.constant 0 : index
    %43 = vector.load %arg8[%c10, %c0_43] : memref<16x32xf32, #tpu.memory_space<vmem>>, vector<1x32xf32>
    tpu.vector_store %arg8[%c10, %c0_43], %42 {strides = array<i32>} : memref<16x32xf32, #tpu.memory_space<vmem>>, vector<1x32xf32>,
    %c1_44 = arith.constant 1 : index
    %c5_45 = arith.constant 5 : index
    %44 = memref.load %arg0[%c1_44, %c5_45] : memref<2x8xi32, #tpu.memory_space<smem>>
    %45 = arith.index_cast %44 : i32 to index
    %c0_46 = arith.constant 0 : index
    %46 = vector.load %arg1[%45, %c0_46] : memref<16x32xf32, #tpu.memory_space<vmem>>, vector<1x32xf32>
    %c11 = arith.constant 11 : index
    %c0_47 = arith.constant 0 : index
    %47 = vector.load %arg8[%c11, %c0_47] : memref<16x32xf32, #tpu.memory_space<vmem>>, vector<1x32xf32>
    tpu.vector_store %arg8[%c11, %c0_47], %46 {strides = array<i32>} : memref<16x32xf32, #tpu.memory_space<vmem>>, vector<1x32xf32>,
    %c0_48 = arith.constant 0 : index
    %c6_49 = arith.constant 6 : index
    %48 = memref.load %arg0[%c0_48, %c6_49] : memref<2x8xi32, #tpu.memory_space<smem>>
    %49 = arith.index_cast %48 : i32 to index
    %c0_50 = arith.constant 0 : index
    %50 = vector.load %arg1[%49, %c0_50] : memref<16x32xf32, #tpu.memory_space<vmem>>, vector<1x32xf32>
    %c12 = arith.constant 12 : index
    %c0_51 = arith.constant 0 : index
    %51 = vector.load %arg8[%c12, %c0_51] : memref<16x32xf32, #tpu.memory_space<vmem>>, vector<1x32xf32>
    tpu.vector_store %arg8[%c12, %c0_51], %50 {strides = array<i32>} : memref<16x32xf32, #tpu.memory_space<vmem>>, vector<1x32xf32>,
    %c1_52 = arith.constant 1 : index
    %c6_53 = arith.constant 6 : index
    %52 = memref.load %arg0[%c1_52, %c6_53] : memref<2x8xi32, #tpu.memory_space<smem>>
    %53 = arith.index_cast %52 : i32 to index
    %c0_54 = arith.constant 0 : index
    %54 = vector.load %arg1[%53, %c0_54] : memref<16x32xf32, #tpu.memory_space<vmem>>, vector<1x32xf32>
    %c13 = arith.constant 13 : index
    %c0_55 = arith.constant 0 : index
    %55 = vector.load %arg8[%c13, %c0_55] : memref<16x32xf32, #tpu.memory_space<vmem>>, vector<1x32xf32>
    tpu.vector_store %arg8[%c13, %c0_55], %54 {strides = array<i32>} : memref<16x32xf32, #tpu.memory_space<vmem>>, vector<1x32xf32>,
    %c0_56 = arith.constant 0 : index
    %c7_57 = arith.constant 7 : index
    %56 = memref.load %arg0[%c0_56, %c7_57] : memref<2x8xi32, #tpu.memory_space<smem>>
    %57 = arith.index_cast %56 : i32 to index
    %c0_58 = arith.constant 0 : index
    %58 = vector.load %arg1[%57, %c0_58] : memref<16x32xf32, #tpu.memory_space<vmem>>, vector<1x32xf32>
    %c14 = arith.constant 14 : index
    %c0_59 = arith.constant 0 : index
    %59 = vector.load %arg8[%c14, %c0_59] : memref<16x32xf32, #tpu.memory_space<vmem>>, vector<1x32xf32>
    tpu.vector_store %arg8[%c14, %c0_59], %58 {strides = array<i32>} : memref<16x32xf32, #tpu.memory_space<vmem>>, vector<1x32xf32>,
    %c1_60 = arith.constant 1 : index
    %c7_61 = arith.constant 7 : index
    %60 = memref.load %arg0[%c1_60, %c7_61] : memref<2x8xi32, #tpu.memory_space<smem>>
    %61 = arith.index_cast %60 : i32 to index
    %c0_62 = arith.constant 0 : index
    %62 = vector.load %arg1[%61, %c0_62] : memref<16x32xf32, #tpu.memory_space<vmem>>, vector<1x32xf32>
    %c15 = arith.constant 15 : index
    %c0_63 = arith.constant 0 : index
    %63 = vector.load %arg8[%c15, %c0_63] : memref<16x32xf32, #tpu.memory_space<vmem>>, vector<1x32xf32>
    tpu.vector_store %arg8[%c15, %c0_63], %62 {strides = array<i32>} : memref<16x32xf32, #tpu.memory_space<vmem>>, vector<1x32xf32>,
    %c0_64 = arith.constant 0 : index
    %c0_65 = arith.constant 0 : index
    %64 = vector.load %arg8[%c0_64, %c0_65] : memref<16x32xf32, #tpu.memory_space<vmem>>, vector<16x32xf32>
    %c0_66 = arith.constant 0 : index
    %c0_67 = arith.constant 0 : index
    %65 = vector.load %arg2[%c0_66, %c0_67] : memref<32x128xf32, #tpu.memory_space<vmem>>, vector<32x128xf32>
    %cst = arith.constant dense<0.000000e+00> : vector<16x128xf32>
    %66 = tpu.matmul %64, %65, %cst {dimension_numbers = #tpu.dot_dimension_numbers<[1], [0], [0], [1], [0, 0, 1, 1], [], []>} : vector<16x32xf32>, vector<32x128xf32>, vector<16x128xf32> -> vector<16x128xf32>
    %c0_68 = arith.constant 0 : index
    %c0_69 = arith.constant 0 : index
    %67 = vector.load %arg4[%c0_68, %c0_69] : memref<1x128xf32, #tpu.memory_space<vmem>>, vector<1x128xf32>
    %68 = vector.broadcast %67 : vector<1x128xf32> to vector<16x128xf32>
    %69 = arith.addf %66, %68 : vector<16x128xf32>
    %c0_70 = arith.constant 0 : index
    %c0_71 = arith.constant 0 : index
    %70 = vector.load %arg3[%c0_70, %c0_71] : memref<32x128xf32, #tpu.memory_space<vmem>>, vector<32x128xf32>
    %71 = tpu.iota {dimensions = array<i32: 1>} : vector<2x128xi32>
    %c64_i32 = arith.constant 64 : i32
    %72 = vector.broadcast %c64_i32 : i32 to vector<2x128xi32>
    %73 = arith.cmpi sge, %71, %72 : vector<2x128xi32>
    %c96_i32 = arith.constant 96 : i32
    %74 = vector.broadcast %c96_i32 : i32 to vector<2x128xi32>
    %75 = arith.cmpi slt, %71, %74 : vector<2x128xi32>
    %76 = arith.andi %73, %75 : vector<2x128xi1>
    %cst_72 = arith.constant 1.000000e+00 : f32
    %cst_73 = arith.constant 5.000000e-01 : f32
    %77 = vector.broadcast %cst_72 : f32 to vector<2x128xf32>
    %78 = vector.broadcast %cst_73 : f32 to vector<2x128xf32>
    %79 = arith.select %76, %77, %78 : vector<2x128xi1>, vector<2x128xf32>
    %cst_74 = arith.constant 0.000000e+00 : f32
    %80 = vector.broadcast %cst_74 : f32 to vector<2x32xf32>
    %cst_75 = arith.constant 0.000000e+00 : f32
    %81 = vector.broadcast %cst_75 : f32 to vector<2x32xf32>
    %82 = vector.extract_strided_slice %69 {offsets = [0, 0], sizes = [2, 128], strides = [1, 1]} : vector<16x128xf32> to vector<2x128xf32>
    %cst_76 = arith.constant dense<0.000000e+00> : vector<2x128xf32>
    %83 = tpu.matmul %80, %70, %cst_76 {dimension_numbers = #tpu.dot_dimension_numbers<[1], [0], [0], [1], [0, 0, 1, 1], [], []>} : vector<2x32xf32>, vector<32x128xf32>, vector<2x128xf32> -> vector<2x128xf32>
    %84 = arith.addf %82, %83 : vector<2x128xf32>
    %85 = arith.mulf %84, %79 : vector<2x128xf32>
    %86 = math.tanh %85 : vector<2x128xf32>
    %cst_77 = arith.constant 5.000000e-01 : f32
    %87 = vector.broadcast %cst_77 : f32 to vector<2x128xf32>
    %88 = arith.mulf %87, %86 : vector<2x128xf32>
    %cst_78 = arith.constant 5.000000e-01 : f32
    %89 = vector.broadcast %cst_78 : f32 to vector<2x128xf32>
    %90 = arith.addf %88, %89 : vector<2x128xf32>
    %91 = arith.select %76, %86, %90 : vector<2x128xi1>, vector<2x128xf32>
    %92 = vector.extract_strided_slice %91 {offsets = [0, 0], sizes = [2, 32], strides = [1, 1]} : vector<2x128xf32> to vector<2x32xf32>
    %93 = vector.extract_strided_slice %91 {offsets = [0, 32], sizes = [2, 32], strides = [1, 1]} : vector<2x128xf32> to vector<2x32xf32>
    %94 = vector.extract_strided_slice %91 {offsets = [0, 64], sizes = [2, 32], strides = [1, 1]} : vector<2x128xf32> to vector<2x32xf32>
    %95 = vector.extract_strided_slice %91 {offsets = [0, 96], sizes = [2, 32], strides = [1, 1]} : vector<2x128xf32> to vector<2x32xf32>
    %96 = arith.mulf %93, %81 : vector<2x32xf32>
    %97 = arith.mulf %92, %94 : vector<2x32xf32>
    %98 = arith.addf %96, %97 : vector<2x32xf32>
    %99 = math.tanh %98 : vector<2x32xf32>
    %100 = arith.mulf %95, %99 : vector<2x32xf32>
    %101 = vector.extract_strided_slice %69 {offsets = [2, 0], sizes = [2, 128], strides = [1, 1]} : vector<16x128xf32> to vector<2x128xf32>
    %cst_79 = arith.constant dense<0.000000e+00> : vector<2x128xf32>
    %102 = tpu.matmul %100, %70, %cst_79 {dimension_numbers = #tpu.dot_dimension_numbers<[1], [0], [0], [1], [0, 0, 1, 1], [], []>} : vector<2x32xf32>, vector<32x128xf32>, vector<2x128xf32> -> vector<2x128xf32>
    %103 = arith.addf %101, %102 : vector<2x128xf32>
    %104 = arith.mulf %103, %79 : vector<2x128xf32>
    %105 = math.tanh %104 : vector<2x128xf32>
    %cst_80 = arith.constant 5.000000e-01 : f32
    %106 = vector.broadcast %cst_80 : f32 to vector<2x128xf32>
    %107 = arith.mulf %106, %105 : vector<2x128xf32>
    %cst_81 = arith.constant 5.000000e-01 : f32
    %108 = vector.broadcast %cst_81 : f32 to vector<2x128xf32>
    %109 = arith.addf %107, %108 : vector<2x128xf32>
    %110 = arith.select %76, %105, %109 : vector<2x128xi1>, vector<2x128xf32>
    %111 = vector.extract_strided_slice %110 {offsets = [0, 0], sizes = [2, 32], strides = [1, 1]} : vector<2x128xf32> to vector<2x32xf32>
    %112 = vector.extract_strided_slice %110 {offsets = [0, 32], sizes = [2, 32], strides = [1, 1]} : vector<2x128xf32> to vector<2x32xf32>
    %113 = vector.extract_strided_slice %110 {offsets = [0, 64], sizes = [2, 32], strides = [1, 1]} : vector<2x128xf32> to vector<2x32xf32>
    %114 = vector.extract_strided_slice %110 {offsets = [0, 96], sizes = [2, 32], strides = [1, 1]} : vector<2x128xf32> to vector<2x32xf32>
    %115 = arith.mulf %112, %98 : vector<2x32xf32>
    %116 = arith.mulf %111, %113 : vector<2x32xf32>
    %117 = arith.addf %115, %116 : vector<2x32xf32>
    %118 = math.tanh %117 : vector<2x32xf32>
    %119 = arith.mulf %114, %118 : vector<2x32xf32>
    %120 = vector.extract_strided_slice %69 {offsets = [4, 0], sizes = [2, 128], strides = [1, 1]} : vector<16x128xf32> to vector<2x128xf32>
    %cst_82 = arith.constant dense<0.000000e+00> : vector<2x128xf32>
    %121 = tpu.matmul %119, %70, %cst_82 {dimension_numbers = #tpu.dot_dimension_numbers<[1], [0], [0], [1], [0, 0, 1, 1], [], []>} : vector<2x32xf32>, vector<32x128xf32>, vector<2x128xf32> -> vector<2x128xf32>
    %122 = arith.addf %120, %121 : vector<2x128xf32>
    %123 = arith.mulf %122, %79 : vector<2x128xf32>
    %124 = math.tanh %123 : vector<2x128xf32>
    %cst_83 = arith.constant 5.000000e-01 : f32
    %125 = vector.broadcast %cst_83 : f32 to vector<2x128xf32>
    %126 = arith.mulf %125, %124 : vector<2x128xf32>
    %cst_84 = arith.constant 5.000000e-01 : f32
    %127 = vector.broadcast %cst_84 : f32 to vector<2x128xf32>
    %128 = arith.addf %126, %127 : vector<2x128xf32>
    %129 = arith.select %76, %124, %128 : vector<2x128xi1>, vector<2x128xf32>
    %130 = vector.extract_strided_slice %129 {offsets = [0, 0], sizes = [2, 32], strides = [1, 1]} : vector<2x128xf32> to vector<2x32xf32>
    %131 = vector.extract_strided_slice %129 {offsets = [0, 32], sizes = [2, 32], strides = [1, 1]} : vector<2x128xf32> to vector<2x32xf32>
    %132 = vector.extract_strided_slice %129 {offsets = [0, 64], sizes = [2, 32], strides = [1, 1]} : vector<2x128xf32> to vector<2x32xf32>
    %133 = vector.extract_strided_slice %129 {offsets = [0, 96], sizes = [2, 32], strides = [1, 1]} : vector<2x128xf32> to vector<2x32xf32>
    %134 = arith.mulf %131, %117 : vector<2x32xf32>
    %135 = arith.mulf %130, %132 : vector<2x32xf32>
    %136 = arith.addf %134, %135 : vector<2x32xf32>
    %137 = math.tanh %136 : vector<2x32xf32>
    %138 = arith.mulf %133, %137 : vector<2x32xf32>
    %139 = vector.extract_strided_slice %69 {offsets = [6, 0], sizes = [2, 128], strides = [1, 1]} : vector<16x128xf32> to vector<2x128xf32>
    %cst_85 = arith.constant dense<0.000000e+00> : vector<2x128xf32>
    %140 = tpu.matmul %138, %70, %cst_85 {dimension_numbers = #tpu.dot_dimension_numbers<[1], [0], [0], [1], [0, 0, 1, 1], [], []>} : vector<2x32xf32>, vector<32x128xf32>, vector<2x128xf32> -> vector<2x128xf32>
    %141 = arith.addf %139, %140 : vector<2x128xf32>
    %142 = arith.mulf %141, %79 : vector<2x128xf32>
    %143 = math.tanh %142 : vector<2x128xf32>
    %cst_86 = arith.constant 5.000000e-01 : f32
    %144 = vector.broadcast %cst_86 : f32 to vector<2x128xf32>
    %145 = arith.mulf %144, %143 : vector<2x128xf32>
    %cst_87 = arith.constant 5.000000e-01 : f32
    %146 = vector.broadcast %cst_87 : f32 to vector<2x128xf32>
    %147 = arith.addf %145, %146 : vector<2x128xf32>
    %148 = arith.select %76, %143, %147 : vector<2x128xi1>, vector<2x128xf32>
    %149 = vector.extract_strided_slice %148 {offsets = [0, 0], sizes = [2, 32], strides = [1, 1]} : vector<2x128xf32> to vector<2x32xf32>
    %150 = vector.extract_strided_slice %148 {offsets = [0, 32], sizes = [2, 32], strides = [1, 1]} : vector<2x128xf32> to vector<2x32xf32>
    %151 = vector.extract_strided_slice %148 {offsets = [0, 64], sizes = [2, 32], strides = [1, 1]} : vector<2x128xf32> to vector<2x32xf32>
    %152 = vector.extract_strided_slice %148 {offsets = [0, 96], sizes = [2, 32], strides = [1, 1]} : vector<2x128xf32> to vector<2x32xf32>
    %153 = arith.mulf %150, %136 : vector<2x32xf32>
    %154 = arith.mulf %149, %151 : vector<2x32xf32>
    %155 = arith.addf %153, %154 : vector<2x32xf32>
    %156 = math.tanh %155 : vector<2x32xf32>
    %157 = arith.mulf %152, %156 : vector<2x32xf32>
    %158 = vector.extract_strided_slice %69 {offsets = [8, 0], sizes = [2, 128], strides = [1, 1]} : vector<16x128xf32> to vector<2x128xf32>
    %cst_88 = arith.constant dense<0.000000e+00> : vector<2x128xf32>
    %159 = tpu.matmul %157, %70, %cst_88 {dimension_numbers = #tpu.dot_dimension_numbers<[1], [0], [0], [1], [0, 0, 1, 1], [], []>} : vector<2x32xf32>, vector<32x128xf32>, vector<2x128xf32> -> vector<2x128xf32>
    %160 = arith.addf %158, %159 : vector<2x128xf32>
    %161 = arith.mulf %160, %79 : vector<2x128xf32>
    %162 = math.tanh %161 : vector<2x128xf32>
    %cst_89 = arith.constant 5.000000e-01 : f32
    %163 = vector.broadcast %cst_89 : f32 to vector<2x128xf32>
    %164 = arith.mulf %163, %162 : vector<2x128xf32>
    %cst_90 = arith.constant 5.000000e-01 : f32
    %165 = vector.broadcast %cst_90 : f32 to vector<2x128xf32>
    %166 = arith.addf %164, %165 : vector<2x128xf32>
    %167 = arith.select %76, %162, %166 : vector<2x128xi1>, vector<2x128xf32>
    %168 = vector.extract_strided_slice %167 {offsets = [0, 0], sizes = [2, 32], strides = [1, 1]} : vector<2x128xf32> to vector<2x32xf32>
    %169 = vector.extract_strided_slice %167 {offsets = [0, 32], sizes = [2, 32], strides = [1, 1]} : vector<2x128xf32> to vector<2x32xf32>
    %170 = vector.extract_strided_slice %167 {offsets = [0, 64], sizes = [2, 32], strides = [1, 1]} : vector<2x128xf32> to vector<2x32xf32>
    %171 = vector.extract_strided_slice %167 {offsets = [0, 96], sizes = [2, 32], strides = [1, 1]} : vector<2x128xf32> to vector<2x32xf32>
    %172 = arith.mulf %169, %155 : vector<2x32xf32>
    %173 = arith.mulf %168, %170 : vector<2x32xf32>
    %174 = arith.addf %172, %173 : vector<2x32xf32>
    %175 = math.tanh %174 : vector<2x32xf32>
    %176 = arith.mulf %171, %175 : vector<2x32xf32>
    %177 = vector.extract_strided_slice %69 {offsets = [10, 0], sizes = [2, 128], strides = [1, 1]} : vector<16x128xf32> to vector<2x128xf32>
    %cst_91 = arith.constant dense<0.000000e+00> : vector<2x128xf32>
    %178 = tpu.matmul %176, %70, %cst_91 {dimension_numbers = #tpu.dot_dimension_numbers<[1], [0], [0], [1], [0, 0, 1, 1], [], []>} : vector<2x32xf32>, vector<32x128xf32>, vector<2x128xf32> -> vector<2x128xf32>
    %179 = arith.addf %177, %178 : vector<2x128xf32>
    %180 = arith.mulf %179, %79 : vector<2x128xf32>
    %181 = math.tanh %180 : vector<2x128xf32>
    %cst_92 = arith.constant 5.000000e-01 : f32
    %182 = vector.broadcast %cst_92 : f32 to vector<2x128xf32>
    %183 = arith.mulf %182, %181 : vector<2x128xf32>
    %cst_93 = arith.constant 5.000000e-01 : f32
    %184 = vector.broadcast %cst_93 : f32 to vector<2x128xf32>
    %185 = arith.addf %183, %184 : vector<2x128xf32>
    %186 = arith.select %76, %181, %185 : vector<2x128xi1>, vector<2x128xf32>
    %187 = vector.extract_strided_slice %186 {offsets = [0, 0], sizes = [2, 32], strides = [1, 1]} : vector<2x128xf32> to vector<2x32xf32>
    %188 = vector.extract_strided_slice %186 {offsets = [0, 32], sizes = [2, 32], strides = [1, 1]} : vector<2x128xf32> to vector<2x32xf32>
    %189 = vector.extract_strided_slice %186 {offsets = [0, 64], sizes = [2, 32], strides = [1, 1]} : vector<2x128xf32> to vector<2x32xf32>
    %190 = vector.extract_strided_slice %186 {offsets = [0, 96], sizes = [2, 32], strides = [1, 1]} : vector<2x128xf32> to vector<2x32xf32>
    %191 = arith.mulf %188, %174 : vector<2x32xf32>
    %192 = arith.mulf %187, %189 : vector<2x32xf32>
    %193 = arith.addf %191, %192 : vector<2x32xf32>
    %194 = math.tanh %193 : vector<2x32xf32>
    %195 = arith.mulf %190, %194 : vector<2x32xf32>
    %196 = vector.extract_strided_slice %69 {offsets = [12, 0], sizes = [2, 128], strides = [1, 1]} : vector<16x128xf32> to vector<2x128xf32>
    %cst_94 = arith.constant dense<0.000000e+00> : vector<2x128xf32>
    %197 = tpu.matmul %195, %70, %cst_94 {dimension_numbers = #tpu.dot_dimension_numbers<[1], [0], [0], [1], [0, 0, 1, 1], [], []>} : vector<2x32xf32>, vector<32x128xf32>, vector<2x128xf32> -> vector<2x128xf32>
    %198 = arith.addf %196, %197 : vector<2x128xf32>
    %199 = arith.mulf %198, %79 : vector<2x128xf32>
    %200 = math.tanh %199 : vector<2x128xf32>
    %cst_95 = arith.constant 5.000000e-01 : f32
    %201 = vector.broadcast %cst_95 : f32 to vector<2x128xf32>
    %202 = arith.mulf %201, %200 : vector<2x128xf32>
    %cst_96 = arith.constant 5.000000e-01 : f32
    %203 = vector.broadcast %cst_96 : f32 to vector<2x128xf32>
    %204 = arith.addf %202, %203 : vector<2x128xf32>
    %205 = arith.select %76, %200, %204 : vector<2x128xi1>, vector<2x128xf32>
    %206 = vector.extract_strided_slice %205 {offsets = [0, 0], sizes = [2, 32], strides = [1, 1]} : vector<2x128xf32> to vector<2x32xf32>
    %207 = vector.extract_strided_slice %205 {offsets = [0, 32], sizes = [2, 32], strides = [1, 1]} : vector<2x128xf32> to vector<2x32xf32>
    %208 = vector.extract_strided_slice %205 {offsets = [0, 64], sizes = [2, 32], strides = [1, 1]} : vector<2x128xf32> to vector<2x32xf32>
    %209 = vector.extract_strided_slice %205 {offsets = [0, 96], sizes = [2, 32], strides = [1, 1]} : vector<2x128xf32> to vector<2x32xf32>
    %210 = arith.mulf %207, %193 : vector<2x32xf32>
    %211 = arith.mulf %206, %208 : vector<2x32xf32>
    %212 = arith.addf %210, %211 : vector<2x32xf32>
    %213 = math.tanh %212 : vector<2x32xf32>
    %214 = arith.mulf %209, %213 : vector<2x32xf32>
    %215 = vector.extract_strided_slice %69 {offsets = [14, 0], sizes = [2, 128], strides = [1, 1]} : vector<16x128xf32> to vector<2x128xf32>
    %cst_97 = arith.constant dense<0.000000e+00> : vector<2x128xf32>
    %216 = tpu.matmul %214, %70, %cst_97 {dimension_numbers = #tpu.dot_dimension_numbers<[1], [0], [0], [1], [0, 0, 1, 1], [], []>} : vector<2x32xf32>, vector<32x128xf32>, vector<2x128xf32> -> vector<2x128xf32>
    %217 = arith.addf %215, %216 : vector<2x128xf32>
    %218 = arith.mulf %217, %79 : vector<2x128xf32>
    %219 = math.tanh %218 : vector<2x128xf32>
    %cst_98 = arith.constant 5.000000e-01 : f32
    %220 = vector.broadcast %cst_98 : f32 to vector<2x128xf32>
    %221 = arith.mulf %220, %219 : vector<2x128xf32>
    %cst_99 = arith.constant 5.000000e-01 : f32
    %222 = vector.broadcast %cst_99 : f32 to vector<2x128xf32>
    %223 = arith.addf %221, %222 : vector<2x128xf32>
    %224 = arith.select %76, %219, %223 : vector<2x128xi1>, vector<2x128xf32>
    %225 = vector.extract_strided_slice %224 {offsets = [0, 0], sizes = [2, 32], strides = [1, 1]} : vector<2x128xf32> to vector<2x32xf32>
    %226 = vector.extract_strided_slice %224 {offsets = [0, 32], sizes = [2, 32], strides = [1, 1]} : vector<2x128xf32> to vector<2x32xf32>
    %227 = vector.extract_strided_slice %224 {offsets = [0, 64], sizes = [2, 32], strides = [1, 1]} : vector<2x128xf32> to vector<2x32xf32>
    %228 = vector.extract_strided_slice %224 {offsets = [0, 96], sizes = [2, 32], strides = [1, 1]} : vector<2x128xf32> to vector<2x32xf32>
    %229 = arith.mulf %226, %212 : vector<2x32xf32>
    %230 = arith.mulf %225, %227 : vector<2x32xf32>
    %231 = arith.addf %229, %230 : vector<2x32xf32>
    %232 = math.tanh %231 : vector<2x32xf32>
    %233 = arith.mulf %228, %232 : vector<2x32xf32>
    %c0_100 = arith.constant 0 : index
    %c0_101 = arith.constant 0 : index
    %234 = vector.load %arg5[%c0_100, %c0_101] : memref<32x128xf32, #tpu.memory_space<vmem>>, vector<32x128xf32>
    %cst_102 = arith.constant dense<0.000000e+00> : vector<2x128xf32>
    %235 = tpu.matmul %233, %234, %cst_102 {dimension_numbers = #tpu.dot_dimension_numbers<[1], [0], [0], [1], [0, 0, 1, 1], [], []>} : vector<2x32xf32>, vector<32x128xf32>, vector<2x128xf32> -> vector<2x128xf32>
    %c0_103 = arith.constant 0 : index
    %c0_104 = arith.constant 0 : index
    %236 = vector.load %arg6[%c0_103, %c0_104] : memref<1x128xf32, #tpu.memory_space<vmem>>, vector<1x128xf32>
    %237 = vector.broadcast %236 : vector<1x128xf32> to vector<2x128xf32>
    %238 = arith.addf %235, %237 : vector<2x128xf32>
    %c0_105 = arith.constant 0 : index
    %c0_106 = arith.constant 0 : index
    %239 = vector.load %arg7[%c0_105, %c0_106] : memref<2x128xf32, #tpu.memory_space<vmem>>, vector<2x128xf32>
    tpu.vector_store %arg7[%c0_105, %c0_106], %238 {strides = array<i32>} : memref<2x128xf32, #tpu.memory_space<vmem>>, vector<2x128xf32>,
    return
  }
}

</mosaic_0001>

<llo_original>
// kernel: lstm1_forward.1
$region0: #{lstm1_forward.1}
  #allocation0 [shape = 'u32[]', space=smem, size = 0x4, offset = 0x4, fixed_abs, tag = 'smem constant byte address 0x4 - core index']
  #allocation1 [shape = 'u32[144,128]{1,0:T(1,128)}', space=vmem, size = 0x12000, scoped, tag = 'internal scratch']
  #allocation2 [shape = 'f32[16,32]{1,0:T(8,128)}', space=vmem, size = 0x2000, scoped, tag = 'scratch operand']
  %s0 = inlined_call_operand.hbm [shape: s32[2,8], index: 0, kind: input, shape index: {}]
  %s1 = inlined_call_operand.hbm [shape: f32[16,32], index: 1, kind: input, shape index: {}]
  %s2 = inlined_call_operand.hbm [shape: f32[32,128], index: 2, kind: input, shape index: {}]
  %s3 = inlined_call_operand.hbm [shape: f32[32,128], index: 3, kind: input, shape index: {}]
  %s4 = inlined_call_operand.vmem [shape: f32[1,128], index: 4, kind: input, shape index: {}]
  %s5 = inlined_call_operand.hbm [shape: f32[32,128], index: 5, kind: input, shape index: {}]
  %s6 = inlined_call_operand.vmem [shape: f32[1,128], index: 6, kind: input, shape index: {}]
  %s7 = inlined_call_operand.hbm [shape: f32[2,128], index: 7, kind: output, shape index: {}]
  %s8 = sld [smem:[#allocation0]]
  $region58: #{lstm1_forward.1} parent=0
    _
  %s10 = ssub.s32 1, %s8
  %s11 = scalar_select 0, %s10, %s8
  $region1: #{lstm1_forward.1} parent=0
    #allocation3 [shape = 'u8[1024]{0}', space=smem, size = 0x400, scoped, tag = 'input window, operand 0, single buffered']
    #allocation4 [shape = 's32[1]{0}', space=sflag, size = 0x4, scoped, tag = 'scoped memory for lstm1_forward.1']
    #allocation5 [shape = 's32[1]{0}', space=sflag, size = 0x4, scoped, tag = 'scoped memory for lstm1_forward.1']
    #allocation6 [shape = 's32[1]{0}', space=sflag, size = 0x4, scoped, tag = 'scoped memory for lstm1_forward.1']
    #allocation7 [shape = 'u8[8192]{0}', space=vmem, size = 0x2000, scoped, tag = 'input window, operand 1, single buffered']
    #allocation8 [shape = 'u8[16384]{0}', space=vmem, size = 0x4000, scoped, tag = 'input window, operand 2, single buffered']
    #allocation9 [shape = 's32[1]{0}', space=sflag, size = 0x4, scoped, tag = 'scoped memory for lstm1_forward.1']
    #allocation10 [shape = 'u8[16384]{0}', space=vmem, size = 0x4000, scoped, tag = 'input window, operand 3, single buffered']
    #allocation11 [shape = 'u8[16384]{0}', space=vmem, size = 0x4000, scoped, tag = 'input window, operand 5, single buffered']
    #allocation12 [shape = 's32[1]{0}', space=sflag, size = 0x4, scoped, tag = 'scoped memory for lstm1_forward.1']
    #allocation13 [shape = 'u8[1024]{0}', space=vmem, size = 0x400, scoped, tag = 'output window, operand 0, single buffered']
    %12 = vsyncpa [#allocation6], 0
    %13 = vsyncpa [#allocation4], 0
    %14 = vsyncpa [#allocation9], 0
    %15 = vsyncpa [#allocation12], 0
    %16 = vsyncpa [#allocation5], 0
    // Predicated region
    $region2: #{lstm1_forward.1} parent=1 // pred_check
      _
    $region3: #{lstm1_forward.1} parent=1 // pred_check_branch
      %18 = sbr.rel (0) target = $region5
    $region4: #{lstm1_forward.1} parent=1 // pred_region
      %s20 = ssub.s32 32, 32
      %21 = vsyncadd [#allocation6], %s20
      %24 = dma.hbm_to_smem %s0, 32, [#allocation3], [#allocation6]
    $region5: #{lstm1_forward.1} parent=1 // pred_fallthru
      _
    // Predicated region
    $region6: #{lstm1_forward.1} parent=1 // pred_check
      _
    $region7: #{lstm1_forward.1} parent=1 // pred_check_branch
      %26 = sbr.rel (0) target = $region9
    $region8: #{lstm1_forward.1} parent=1 // pred_region
      %s28 = ssub.s32 256, 256
      %29 = vsyncadd [#allocation4], %s28
      %s30 = sshll.u32 [#allocation7], 4
      %s31 = int_to_ptr.vmem [resolvable:$true] %s30
      %36 = dma.hbm_to_vmem [thread:$0]  %s1, 256, %s31, [#allocation4], 128, 128, 8
    $region9: #{lstm1_forward.1} parent=1 // pred_fallthru
      _
    // Predicated region
    $region10: #{lstm1_forward.1} parent=1 // pred_check
      _
    $region11: #{lstm1_forward.1} parent=1 // pred_check_branch
      %38 = sbr.rel (0) target = $region13
    $region12: #{lstm1_forward.1} parent=1 // pred_region
      %s40 = ssub.s32 512, 512
      %41 = vsyncadd [#allocation9], %s40
      %s42 = sshll.u32 [#allocation8], 4
      %s43 = int_to_ptr.vmem [resolvable:$true] %s42
      %48 = dma.hbm_to_vmem [thread:$0]  %s2, 512, %s43, [#allocation9], 128, 128, 8
    $region13: #{lstm1_forward.1} parent=1 // pred_fallthru
      _
    // Predicated region
    $region14: #{lstm1_forward.1} parent=1 // pred_check
      _
    $region15: #{lstm1_forward.1} parent=1 // pred_check_branch
      %50 = sbr.rel (0) target = $region17
    $region16: #{lstm1_forward.1} parent=1 // pred_region
      %s52 = ssub.s32 512, 512
      %53 = vsyncadd [#allocation9], %s52
      %s54 = sshll.u32 [#allocation10], 4
      %s55 = int_to_ptr.vmem [resolvable:$true] %s54
      %60 = dma.hbm_to_vmem [thread:$0]  %s3, 512, %s55, [#allocation9], 128, 128, 8
    $region17: #{lstm1_forward.1} parent=1 // pred_fallthru
      _
    // Predicated region
    $region18: #{lstm1_forward.1} parent=1 // pred_check
      _
    $region19: #{lstm1_forward.1} parent=1 // pred_check_branch
      %62 = sbr.rel (0) target = $region21
    $region20: #{lstm1_forward.1} parent=1 // pred_region
      _
    $region21: #{lstm1_forward.1} parent=1 // pred_fallthru
      _
    // Predicated region
    $region22: #{lstm1_forward.1} parent=1 // pred_check
      _
    $region23: #{lstm1_forward.1} parent=1 // pred_check_branch
      %64 = sbr.rel (0) target = $region25
    $region24: #{lstm1_forward.1} parent=1 // pred_region
      %s66 = ssub.s32 512, 512
      %67 = vsyncadd [#allocation12], %s66
      %s68 = sshll.u32 [#allocation11], 4
      %s69 = int_to_ptr.vmem [resolvable:$true] %s68
      %74 = dma.hbm_to_vmem [thread:$0]  %s5, 512, %s69, [#allocation12], 128, 128, 8
    $region25: #{lstm1_forward.1} parent=1 // pred_fallthru
      _
    // Predicated region
    $region26: #{lstm1_forward.1} parent=1 // pred_check
      _
    $region27: #{lstm1_forward.1} parent=1 // pred_check_branch
      %76 = sbr.rel (0) target = $region29
    $region28: #{lstm1_forward.1} parent=1 // pred_region
      _
    $region29: #{lstm1_forward.1} parent=1 // pred_fallthru
      _
    // Predicated region
    $region30: #{lstm1_forward.1} parent=1 // pred_check
      _
    $region31: #{lstm1_forward.1} parent=1 // pred_check_branch
      %78 = sbr.rel (0) target = $region33
    $region32: #{lstm1_forward.1} parent=1 // pred_region
      %79 = dma.done [#allocation6], 32
    $region33: #{lstm1_forward.1} parent=1 // pred_fallthru
      _
    // Predicated region
    $region34: #{lstm1_forward.1} parent=1 // pred_check
      _
    $region35: #{lstm1_forward.1} parent=1 // pred_check_branch
      %81 = sbr.rel (0) target = $region37
    $region36: #{lstm1_forward.1} parent=1 // pred_region
      %82 = dma.done [#allocation4], 256
    $region37: #{lstm1_forward.1} parent=1 // pred_fallthru
      _
    // Predicated region
    $region38: #{lstm1_forward.1} parent=1 // pred_check
      _
    $region39: #{lstm1_forward.1} parent=1 // pred_check_branch
      %84 = sbr.rel (0) target = $region41
    $region40: #{lstm1_forward.1} parent=1 // pred_region
      %85 = dma.done [#allocation9], 512
    $region41: #{lstm1_forward.1} parent=1 // pred_fallthru
      _
    // Predicated region
    $region42: #{lstm1_forward.1} parent=1 // pred_check
      _
    $region43: #{lstm1_forward.1} parent=1 // pred_check_branch
      %87 = sbr.rel (0) target = $region45
    $region44: #{lstm1_forward.1} parent=1 // pred_region
      %88 = dma.done [#allocation9], 512
    $region45: #{lstm1_forward.1} parent=1 // pred_fallthru
      _
    // Predicated region
    $region46: #{lstm1_forward.1} parent=1 // pred_check
      _
    $region47: #{lstm1_forward.1} parent=1 // pred_check_branch
      %90 = sbr.rel (0) target = $region49
    $region48: #{lstm1_forward.1} parent=1 // pred_region
      %91 = dma.done [#allocation12], 512
    $region49: #{lstm1_forward.1} parent=1 // pred_fallthru
      _
    %92 = sfence
    %s93 = sld [smem:[#allocation3]]
    %s94 = scalar_lea.vmem [#allocation7], %s93
    %v95 = vld [vmem:[%s94] sm:$0x1]
    %vm96 = vcmask 253952
    %97 = vst.msk [vmem:[#allocation2] sm:$0x1] %vm96, %v95
    %s98 = sld [smem:[#allocation3 + $0x80]]
    %s99 = scalar_lea.vmem [#allocation7], %s98
    %v100 = vld [vmem:[%s99] sm:$0x1]
    %101 = vst.msk [vmem:[#allocation2 + $0x1] sm:$0x1] %vm96, %v100
    %s102 = sld [smem:[#allocation3 + $0x1]]
    %s103 = scalar_lea.vmem [#allocation7], %s102
    %v104 = vld [vmem:[%s103] sm:$0x1]
    %105 = vst.msk [vmem:[#allocation2 + $0x2] sm:$0x1] %vm96, %v104
    %s106 = sld [smem:[#allocation3 + $0x81]]
    %s107 = scalar_lea.vmem [#allocation7], %s106
    %v108 = vld [vmem:[%s107] sm:$0x1]
    %109 = vst.msk [vmem:[#allocation2 + $0x3] sm:$0x1] %vm96, %v108
    %s110 = sld [smem:[#allocation3 + $0x2]]
    %s111 = scalar_lea.vmem [#allocation7], %s110
    %v112 = vld [vmem:[%s111] sm:$0x1]
    %113 = vst.msk [vmem:[#allocation2 + $0x4] sm:$0x1] %vm96, %v112
    %s114 = sld [smem:[#allocation3 + $0x82]]
    %s115 = scalar_lea.vmem [#allocation7], %s114
    %v116 = vld [vmem:[%s115] sm:$0x1]
    %117 = vst.msk [vmem:[#allocation2 + $0x5] sm:$0x1] %vm96, %v116
    %s118 = sld [smem:[#allocation3 + $0x3]]
    %s119 = scalar_lea.vmem [#allocation7], %s118
    %v120 = vld [vmem:[%s119] sm:$0x1]
    %121 = vst.msk [vmem:[#allocation2 + $0x6] sm:$0x1] %vm96, %v120
    %s122 = sld [smem:[#allocation3 + $0x83]]
    %s123 = scalar_lea.vmem [#allocation7], %s122
    %v124 = vld [vmem:[%s123] sm:$0x1]
    %125 = vst.msk [vmem:[#allocation2 + $0x7] sm:$0x1] %vm96, %v124
    %s126 = sld [smem:[#allocation3 + $0x4]]
    %s127 = scalar_lea.vmem [#allocation7], %s126
    %v128 = vld [vmem:[%s127] sm:$0x1]
    %129 = vst.msk [vmem:[#allocation2 + $0x8] sm:$0x1] %vm96, %v128
    %s130 = sld [smem:[#allocation3 + $0x84]]
    %s131 = scalar_lea.vmem [#allocation7], %s130
    %v132 = vld [vmem:[%s131] sm:$0x1]
    %133 = vst.msk [vmem:[#allocation2 + $0x9] sm:$0x1] %vm96, %v132
    %s134 = sld [smem:[#allocation3 + $0x5]]
    %s135 = scalar_lea.vmem [#allocation7], %s134
    %v136 = vld [vmem:[%s135] sm:$0x1]
    %137 = vst.msk [vmem:[#allocation2 + $0xa] sm:$0x1] %vm96, %v136
    %s138 = sld [smem:[#allocation3 + $0x85]]
    %s139 = scalar_lea.vmem [#allocation7], %s138
    %v140 = vld [vmem:[%s139] sm:$0x1]
    %141 = vst.msk [vmem:[#allocation2 + $0xb] sm:$0x1] %vm96, %v140
    %s142 = sld [smem:[#allocation3 + $0x6]]
    %s143 = scalar_lea.vmem [#allocation7], %s142
    %v144 = vld [vmem:[%s143] sm:$0x1]
    %145 = vst.msk [vmem:[#allocation2 + $0xc] sm:$0x1] %vm96, %v144
    %s146 = sld [smem:[#allocation3 + $0x86]]
    %s147 = scalar_lea.vmem [#allocation7], %s146
    %v148 = vld [vmem:[%s147] sm:$0x1]
    %149 = vst.msk [vmem:[#allocation2 + $0xd] sm:$0x1] %vm96, %v148
    %s150 = sld [smem:[#allocation3 + $0x7]]
    %s151 = scalar_lea.vmem [#allocation7], %s150
    %v152 = vld [vmem:[%s151] sm:$0x1]
    %153 = vst.msk [vmem:[#allocation2 + $0xe] sm:$0x1] %vm96, %v152
    %s154 = sld [smem:[#allocation3 + $0x87]]
    %s155 = scalar_lea.vmem [#allocation7], %s154
    %v156 = vld [vmem:[%s155] sm:$0x1]
    %157 = vst.msk [vmem:[#allocation2 + $0xf] sm:$0x1] %vm96, %v156
    %v158 = vld [vmem:[#allocation2] sm:$0xff]
    %v159 = vld [vmem:[#allocation2 + $0x8] sm:$0xff]
    %v160 = vld [vmem:[#allocation8] sm:$0xff]
    %v161 = vld [vmem:[#allocation8 + $0x8] sm:$0xff]
    %v162 = vld [vmem:[#allocation8 + $0x10] sm:$0xff]
    %v163 = vld [vmem:[#allocation8 + $0x18] sm:$0xff]
    %v164 = vld [vmem:[%s4] sm:$0x1]
    %v166 = vlaneseq
    %v167 = vshrl.u32 %v166, 7
    %v168 = vsub.s32 0, %v167
    %v169 = vrot.slane %v164, %v168
    %vm171 = vcmask 261120
    %v173 = vsel %vm171, %v158, 0
    %v176 = vsel %vm171, %v159, 0
    %178 = vmatprep.subr.mxu0 0.0
    %179 = vmatpush1.msra.mxu0 %v160
    %180 = vmatprep.subr.mxu0 0.0
    %181 = vmatpush1.msra.mxu0 %v161
    %182 = vmatprep.subr.mxu0 0.0
    %183 = vmatpush1.msra.mxu0 %v162
    %184 = vmatprep.subr.mxu0 0.0
    %185 = vmatpush1.msra.mxu0 %v163
    %186 = vmatprep.subr.mxu0 0.0
    %187 = vmatpush1.msra.mxu0 0.0
    %188 = vmatprep.subr.mxu0 0.0
    %189 = vmatpush1.msra.mxu0 0.0
    %190 = vmatprep.subr.mxu0 0.0
    %191 = vmatpush1.msra.mxu0 0.0
    %192 = vmatprep.subr.mxu0 0.0
    %193 = vmatpush1.msra.mxu0 0.0
    %194 = vmatprep.subr.mxu0 0.0
    %195 = vmatpush1.msra.mxu0 0.0
    %196 = vmatprep.subr.mxu0 0.0
    %197 = vmatpush1.msra.mxu0 0.0
    %198 = vmatprep.subr.mxu0 0.0
    %199 = vmatpush1.msra.mxu0 0.0
    %200 = vmatprep.subr.mxu0 0.0
    %201 = vmatpush1.msra.mxu0 0.0
    %202 = vmatprep.subr.mxu0 0.0
    %203 = vmatpush1.msra.mxu0 0.0
    %204 = vmatprep.subr.mxu0 0.0
    %205 = vmatpush1.msra.mxu0 0.0
    %206 = vmatprep.subr.mxu0 0.0
    %207 = vmatpush1.msra.mxu0 0.0
    %208 = vmatprep.subr.mxu0 0.0
    %209 = vmatpush1.msra.mxu0 0.0
    %210 = vmatprep.subr.mxu0 0.0
    %211 = vmatpush1.msra.mxu0 0.0
    %212 = vmatprep.subr.mxu0 0.0
    %213 = vmatpush1.msra.mxu0 0.0
    %214 = vmatprep.subr.mxu0 0.0
    %215 = vmatpush1.msra.mxu0 0.0
    %216 = vmatprep.subr.mxu0 0.0
    %217 = vmatpush1.msra.mxu0 0.0
    %218 = vmatprep.subr.mxu0 0.0
    %219 = vmatpush1.msra.mxu0 0.0
    %220 = vmatprep.subr.mxu0 0.0
    %221 = vmatpush1.msra.mxu0 0.0
    %222 = vmatprep.subr.mxu0 0.0
    %223 = vmatpush1.msra.mxu0 0.0
    %224 = vmatprep.subr.mxu0 0.0
    %225 = vmatpush1.msra.mxu0 0.0
    %226 = vmatprep.subr.mxu0 0.0
    %227 = vmatpush1.msra.mxu0 0.0
    %228 = vmatprep.subr.mxu0 0.0
    %229 = vmatpush1.msra.mxu0 0.0
    %230 = vmatprep.subr.mxu0 0.0
    %231 = vmatpush1.msra.mxu0 0.0
    %232 = vmatprep.subr.mxu0 0.0
    %233 = vmatpush1.msra.mxu0 0.0
    %234 = vmatprep.subr.mxu0 0.0
    %235 = vmatpush1.msra.mxu0 0.0
    %236 = vmatprep.subr.mxu0 0.0
    %237 = vmatpush1.msra.mxu0 0.0
    %238 = vmatprep.subr.mxu0 0.0
    %239 = vmatpush1.msra.mxu0 0.0
    %240 = vmatprep.subr.mxu0 0.0
    %241 = vmatpush1.msra.mxu0 0.0
    %242 = vmatprep.mubr.f32.mxu0 0.0
    %243 = vmatmul.mubr.f32.gmra.mrb[0].mxu0 %v173
    %v244 = vpop.f32.mrb[0].mxu0
    %v245 = vadd.f32 %v169, %v244
    %v246 = vpop.f32.mrb[0].mxu0
    %247 = vmatprep.mubr.f32.mxu0 0.0
    %248 = vmatmul.mubr.f32.gmra.mrb[0].mxu0 %v176
    %v249 = vpop.f32.mrb[0].mxu0
    %v250 = vadd.f32 %v169, %v249
    %v251 = vpop.f32.mrb[0].mxu0
    %252 = vdwg.mxu0
    %v253 = vld [vmem:[#allocation10] sm:$0xff]
    %v254 = vld [vmem:[#allocation10 + $0x8] sm:$0xff]
    %v255 = vld [vmem:[#allocation10 + $0x10] sm:$0xff]
    %v256 = vld [vmem:[#allocation10 + $0x18] sm:$0xff]
    %v257 = vlaneseq
    %v258 = vand.u32 %v257, 127
    %vm259 = vcmp.ge.s32.totalorder %v258, 64
    %vm260 = vcmp.lt.s32.totalorder %v258, 96
    %vm261 = vmand %vm259, %vm260
    %v262 = vsel %vm261, 1.0, 0.5
    %v264 = vsel %vm171, 0.0, 0
    %266 = vmatprep.subr.mxu0 0.0
    %267 = vmatpush1.msra.mxu0 %v253
    %268 = vmatprep.subr.mxu0 0.0
    %269 = vmatpush1.msra.mxu0 %v254
    %270 = vmatprep.subr.mxu0 0.0
    %271 = vmatpush1.msra.mxu0 %v255
    %272 = vmatprep.subr.mxu0 0.0
    %273 = vmatpush1.msra.mxu0 %v256
    %274 = vmatprep.subr.mxu0 0.0
    %275 = vmatpush1.msra.mxu0 0.0
    %276 = vmatprep.subr.mxu0 0.0
    %277 = vmatpush1.msra.mxu0 0.0
    %278 = vmatprep.subr.mxu0 0.0
    %279 = vmatpush1.msra.mxu0 0.0
    %280 = vmatprep.subr.mxu0 0.0
    %281 = vmatpush1.msra.mxu0 0.0
    %282 = vmatprep.subr.mxu0 0.0
    %283 = vmatpush1.msra.mxu0 0.0
    %284 = vmatprep.subr.mxu0 0.0
    %285 = vmatpush1.msra.mxu0 0.0
    %286 = vmatprep.subr.mxu0 0.0
    %287 = vmatpush1.msra.mxu0 0.0
    %288 = vmatprep.subr.mxu0 0.0
    %289 = vmatpush1.msra.mxu0 0.0
    %290 = vmatprep.subr.mxu0 0.0
    %291 = vmatpush1.msra.mxu0 0.0
    %292 = vmatprep.subr.mxu0 0.0
    %293 = vmatpush1.msra.mxu0 0.0
    %294 = vmatprep.subr.mxu0 0.0
    %295 = vmatpush1.msra.mxu0 0.0
    %296 = vmatprep.subr.mxu0 0.0
    %297 = vmatpush1.msra.mxu0 0.0
    %298 = vmatprep.subr.mxu0 0.0
    %299 = vmatpush1.msra.mxu0 0.0
    %300 = vmatprep.subr.mxu0 0.0
    %301 = vmatpush1.msra.mxu0 0.0
    %302 = vmatprep.subr.mxu0 0.0
    %303 = vmatpush1.msra.mxu0 0.0
    %304 = vmatprep.subr.mxu0 0.0
    %305 = vmatpush1.msra.mxu0 0.0
    %306 = vmatprep.subr.mxu0 0.0
    %307 = vmatpush1.msra.mxu0 0.0
    %308 = vmatprep.subr.mxu0 0.0
    %309 = vmatpush1.msra.mxu0 0.0
    %310 = vmatprep.subr.mxu0 0.0
    %311 = vmatpush1.msra.mxu0 0.0
    %312 = vmatprep.subr.mxu0 0.0
    %313 = vmatpush1.msra.mxu0 0.0
    %314 = vmatprep.subr.mxu0 0.0
    %315 = vmatpush1.msra.mxu0 0.0
    %316 = vmatprep.subr.mxu0 0.0
    %317 = vmatpush1.msra.mxu0 0.0
    %318 = vmatprep.subr.mxu0 0.0
    %319 = vmatpush1.msra.mxu0 0.0
    %320 = vmatprep.subr.mxu0 0.0
    %321 = vmatpush1.msra.mxu0 0.0
    %322 = vmatprep.subr.mxu0 0.0
    %323 = vmatpush1.msra.mxu0 0.0
    %324 = vmatprep.subr.mxu0 0.0
    %325 = vmatpush1.msra.mxu0 0.0
    %326 = vmatprep.subr.mxu0 0.0
    %327 = vmatpush1.msra.mxu0 0.0
    %328 = vmatprep.subr.mxu0 0.0
    %329 = vmatpush1.msra.mxu0 0.0
    %330 = vmatprep.mubr.f32.mxu0 0.0
    %331 = vmatmul.mubr.f32.gmra.mrb[0].mxu0 %v264
    %v332 = vpop.f32.mrb[0].mxu0
    %v333 = vadd.f32 0.0, %v332
    %v334 = vpop.f32.mrb[0].mxu0
    %335 = vdwg.mxu0
    %v336 = vadd.f32 %v245, %v333
    %v337 = vmul.f32 %v336, %v262
    %v338 = vtanh.pop %v337
    %v339 = vmul.f32 %v338, 0.5
    %v340 = vadd.f32 %v339, 0.5
    %v341 = vsel %vm261, %v338, %v340
    %v342 = vmul.f32 %v341, 0.0
    %344 = vrot.lane.b32.xlu0 %v341, 64
    %v345 = vpop.permute.xlu0 %344
    %v347 = vmul.f32 %v341, %v345
    %349 = vrot.lane.b32.xlu0 %v347, 32
    %v350 = vpop.permute.xlu0 %349
    %v352 = vadd.f32 %v342, %v350
    %v353 = vtanh.pop %v352
    %355 = vrot.lane.b32.xlu0 %v353, 64
    %v356 = vpop.permute.xlu0 %355
    %v358 = vmul.f32 %v341, %v356
    %360 = vrot.lane.b32.xlu0 %v358, 32
    %v361 = vpop.permute.xlu0 %360
    %v362 = vsel %vm171, %v361, 0
    %364 = vmatprep.subr.mxu0 0.0
    %365 = vmatpush1.msra.mxu0 %v253
    %366 = vmatprep.subr.mxu0 0.0
    %367 = vmatpush1.msra.mxu0 %v254
    %368 = vmatprep.subr.mxu0 0.0
    %369 = vmatpush1.msra.mxu0 %v255
    %370 = vmatprep.subr.mxu0 0.0
    %371 = vmatpush1.msra.mxu0 %v256
    %372 = vmatprep.subr.mxu0 0.0
    %373 = vmatpush1.msra.mxu0 0.0
    %374 = vmatprep.subr.mxu0 0.0
    %375 = vmatpush1.msra.mxu0 0.0
    %376 = vmatprep.subr.mxu0 0.0
    %377 = vmatpush1.msra.mxu0 0.0
    %378 = vmatprep.subr.mxu0 0.0
    %379 = vmatpush1.msra.mxu0 0.0
    %380 = vmatprep.subr.mxu0 0.0
    %381 = vmatpush1.msra.mxu0 0.0
    %382 = vmatprep.subr.mxu0 0.0
    %383 = vmatpush1.msra.mxu0 0.0
    %384 = vmatprep.subr.mxu0 0.0
    %385 = vmatpush1.msra.mxu0 0.0
    %386 = vmatprep.subr.mxu0 0.0
    %387 = vmatpush1.msra.mxu0 0.0
    %388 = vmatprep.subr.mxu0 0.0
    %389 = vmatpush1.msra.mxu0 0.0
    %390 = vmatprep.subr.mxu0 0.0
    %391 = vmatpush1.msra.mxu0 0.0
    %392 = vmatprep.subr.mxu0 0.0
    %393 = vmatpush1.msra.mxu0 0.0
    %394 = vmatprep.subr.mxu0 0.0
    %395 = vmatpush1.msra.mxu0 0.0
    %396 = vmatprep.subr.mxu0 0.0
    %397 = vmatpush1.msra.mxu0 0.0
    %398 = vmatprep.subr.mxu0 0.0
    %399 = vmatpush1.msra.mxu0 0.0
    %400 = vmatprep.subr.mxu0 0.0
    %401 = vmatpush1.msra.mxu0 0.0
    %402 = vmatprep.subr.mxu0 0.0
    %403 = vmatpush1.msra.mxu0 0.0
    %404 = vmatprep.subr.mxu0 0.0
    %405 = vmatpush1.msra.mxu0 0.0
    %406 = vmatprep.subr.mxu0 0.0
    %407 = vmatpush1.msra.mxu0 0.0
    %408 = vmatprep.subr.mxu0 0.0
    %409 = vmatpush1.msra.mxu0 0.0
    %410 = vmatprep.subr.mxu0 0.0
    %411 = vmatpush1.msra.mxu0 0.0
    %412 = vmatprep.subr.mxu0 0.0
    %413 = vmatpush1.msra.mxu0 0.0
    %414 = vmatprep.subr.mxu0 0.0
    %415 = vmatpush1.msra.mxu0 0.0
    %416 = vmatprep.subr.mxu0 0.0
    %417 = vmatpush1.msra.mxu0 0.0
    %418 = vmatprep.subr.mxu0 0.0
    %419 = vmatpush1.msra.mxu0 0.0
    %420 = vmatprep.subr.mxu0 0.0
    %421 = vmatpush1.msra.mxu0 0.0
    %422 = vmatprep.subr.mxu0 0.0
    %423 = vmatpush1.msra.mxu0 0.0
    %424 = vmatprep.subr.mxu0 0.0
    %425 = vmatpush1.msra.mxu0 0.0
    %426 = vmatprep.subr.mxu0 0.0
    %427 = vmatpush1.msra.mxu0 0.0
    %428 = vmatprep.mubr.f32.mxu0 0.0
    %429 = vmatmul.mubr.f32.gmra.mrb[0].mxu0 %v362
    %v430 = vpop.f32.mrb[0].mxu0
    %v431 = vadd.f32 0.0, %v430
    %v432 = vpop.f32.mrb[0].mxu0
    %433 = vdwg.mxu0
    %v435 = vrot.slane %v431, 6
    %v437 = vadd.f32 %v245, %v435
    %v438 = vmul.f32 %v437, %v262
    %v439 = vtanh.pop %v438
    %v440 = vmul.f32 %v439, 0.5
    %v441 = vadd.f32 %v440, 0.5
    %v442 = vsel %vm261, %v439, %v441
    %v444 = vrot.slane %v352, 6
    %v446 = vmul.f32 %v442, %v444
    %448 = vrot.lane.b32.xlu0 %v442, 64
    %v449 = vpop.permute.xlu0 %448
    %v451 = vmul.f32 %v442, %v449
    %453 = vrot.lane.b32.xlu0 %v451, 32
    %v454 = vpop.permute.xlu0 %453
    %v456 = vadd.f32 %v446, %v454
    %v457 = vtanh.pop %v456
    %459 = vrot.lane.b32.xlu0 %v457, 64
    %v460 = vpop.permute.xlu0 %459
    %v462 = vmul.f32 %v442, %v460
    %v464 = vrot.slane %v462, 2
    %465 = vrot.lane.b32.xlu0 %v464, 32
    %v466 = vpop.permute.xlu0 %465
    %v467 = vsel %vm171, %v466, 0
    %469 = vmatprep.subr.mxu0 0.0
    %470 = vmatpush1.msra.mxu0 %v253
    %471 = vmatprep.subr.mxu0 0.0
    %472 = vmatpush1.msra.mxu0 %v254
    %473 = vmatprep.subr.mxu0 0.0
    %474 = vmatpush1.msra.mxu0 %v255
    %475 = vmatprep.subr.mxu0 0.0
    %476 = vmatpush1.msra.mxu0 %v256
    %477 = vmatprep.subr.mxu0 0.0
    %478 = vmatpush1.msra.mxu0 0.0
    %479 = vmatprep.subr.mxu0 0.0
    %480 = vmatpush1.msra.mxu0 0.0
    %481 = vmatprep.subr.mxu0 0.0
    %482 = vmatpush1.msra.mxu0 0.0
    %483 = vmatprep.subr.mxu0 0.0
    %484 = vmatpush1.msra.mxu0 0.0
    %485 = vmatprep.subr.mxu0 0.0
    %486 = vmatpush1.msra.mxu0 0.0
    %487 = vmatprep.subr.mxu0 0.0
    %488 = vmatpush1.msra.mxu0 0.0
    %489 = vmatprep.subr.mxu0 0.0
    %490 = vmatpush1.msra.mxu0 0.0
    %491 = vmatprep.subr.mxu0 0.0
    %492 = vmatpush1.msra.mxu0 0.0
    %493 = vmatprep.subr.mxu0 0.0
    %494 = vmatpush1.msra.mxu0 0.0
    %495 = vmatprep.subr.mxu0 0.0
    %496 = vmatpush1.msra.mxu0 0.0
    %497 = vmatprep.subr.mxu0 0.0
    %498 = vmatpush1.msra.mxu0 0.0
    %499 = vmatprep.subr.mxu0 0.0
    %500 = vmatpush1.msra.mxu0 0.0
    %501 = vmatprep.subr.mxu0 0.0
    %502 = vmatpush1.msra.mxu0 0.0
    %503 = vmatprep.subr.mxu0 0.0
    %504 = vmatpush1.msra.mxu0 0.0
    %505 = vmatprep.subr.mxu0 0.0
    %506 = vmatpush1.msra.mxu0 0.0
    %507 = vmatprep.subr.mxu0 0.0
    %508 = vmatpush1.msra.mxu0 0.0
    %509 = vmatprep.subr.mxu0 0.0
    %510 = vmatpush1.msra.mxu0 0.0
    %511 = vmatprep.subr.mxu0 0.0
    %512 = vmatpush1.msra.mxu0 0.0
    %513 = vmatprep.subr.mxu0 0.0
    %514 = vmatpush1.msra.mxu0 0.0
    %515 = vmatprep.subr.mxu0 0.0
    %516 = vmatpush1.msra.mxu0 0.0
    %517 = vmatprep.subr.mxu0 0.0
    %518 = vmatpush1.msra.mxu0 0.0
    %519 = vmatprep.subr.mxu0 0.0
    %520 = vmatpush1.msra.mxu0 0.0
    %521 = vmatprep.subr.mxu0 0.0
    %522 = vmatpush1.msra.mxu0 0.0
    %523 = vmatprep.subr.mxu0 0.0
    %524 = vmatpush1.msra.mxu0 0.0
    %525 = vmatprep.subr.mxu0 0.0
    %526 = vmatpush1.msra.mxu0 0.0
    %527 = vmatprep.subr.mxu0 0.0
    %528 = vmatpush1.msra.mxu0 0.0
    %529 = vmatprep.subr.mxu0 0.0
    %530 = vmatpush1.msra.mxu0 0.0
    %531 = vmatprep.subr.mxu0 0.0
    %532 = vmatpush1.msra.mxu0 0.0
    %533 = vmatprep.mubr.f32.mxu0 0.0
    %534 = vmatmul.mubr.f32.gmra.mrb[0].mxu0 %v467
    %v535 = vpop.f32.mrb[0].mxu0
    %v536 = vadd.f32 0.0, %v535
    %v537 = vpop.f32.mrb[0].mxu0
    %538 = vdwg.mxu0
    %v540 = vrot.slane %v536, 4
    %v542 = vadd.f32 %v245, %v540
    %v543 = vmul.f32 %v542, %v262
    %v544 = vtanh.pop %v543
    %v545 = vmul.f32 %v544, 0.5
    %v546 = vadd.f32 %v545, 0.5
    %v547 = vsel %vm261, %v544, %v546
    %v549 = vrot.slane %v456, 6
    %v551 = vmul.f32 %v547, %v549
    %553 = vrot.lane.b32.xlu0 %v547, 64
    %v554 = vpop.permute.xlu0 %553
    %v556 = vmul.f32 %v547, %v554
    %558 = vrot.lane.b32.xlu0 %v556, 32
    %v559 = vpop.permute.xlu0 %558
    %v561 = vadd.f32 %v551, %v559
    %v562 = vtanh.pop %v561
    %564 = vrot.lane.b32.xlu0 %v562, 64
    %v565 = vpop.permute.xlu0 %564
    %v567 = vmul.f32 %v547, %v565
    %v569 = vrot.slane %v567, 4
    %570 = vrot.lane.b32.xlu0 %v569, 32
    %v571 = vpop.permute.xlu0 %570
    %v572 = vsel %vm171, %v571, 0
    %574 = vmatprep.subr.mxu0 0.0
    %575 = vmatpush1.msra.mxu0 %v253
    %576 = vmatprep.subr.mxu0 0.0
    %577 = vmatpush1.msra.mxu0 %v254
    %578 = vmatprep.subr.mxu0 0.0
    %579 = vmatpush1.msra.mxu0 %v255
    %580 = vmatprep.subr.mxu0 0.0
    %581 = vmatpush1.msra.mxu0 %v256
    %582 = vmatprep.subr.mxu0 0.0
    %583 = vmatpush1.msra.mxu0 0.0
    %584 = vmatprep.subr.mxu0 0.0
    %585 = vmatpush1.msra.mxu0 0.0
    %586 = vmatprep.subr.mxu0 0.0
    %587 = vmatpush1.msra.mxu0 0.0
    %588 = vmatprep.subr.mxu0 0.0
    %589 = vmatpush1.msra.mxu0 0.0
    %590 = vmatprep.subr.mxu0 0.0
    %591 = vmatpush1.msra.mxu0 0.0
    %592 = vmatprep.subr.mxu0 0.0
    %593 = vmatpush1.msra.mxu0 0.0
    %594 = vmatprep.subr.mxu0 0.0
    %595 = vmatpush1.msra.mxu0 0.0
    %596 = vmatprep.subr.mxu0 0.0
    %597 = vmatpush1.msra.mxu0 0.0
    %598 = vmatprep.subr.mxu0 0.0
    %599 = vmatpush1.msra.mxu0 0.0
    %600 = vmatprep.subr.mxu0 0.0
    %601 = vmatpush1.msra.mxu0 0.0
    %602 = vmatprep.subr.mxu0 0.0
    %603 = vmatpush1.msra.mxu0 0.0
    %604 = vmatprep.subr.mxu0 0.0
    %605 = vmatpush1.msra.mxu0 0.0
    %606 = vmatprep.subr.mxu0 0.0
    %607 = vmatpush1.msra.mxu0 0.0
    %608 = vmatprep.subr.mxu0 0.0
    %609 = vmatpush1.msra.mxu0 0.0
    %610 = vmatprep.subr.mxu0 0.0
    %611 = vmatpush1.msra.mxu0 0.0
    %612 = vmatprep.subr.mxu0 0.0
    %613 = vmatpush1.msra.mxu0 0.0
    %614 = vmatprep.subr.mxu0 0.0
    %615 = vmatpush1.msra.mxu0 0.0
    %616 = vmatprep.subr.mxu0 0.0
    %617 = vmatpush1.msra.mxu0 0.0
    %618 = vmatprep.subr.mxu0 0.0
    %619 = vmatpush1.msra.mxu0 0.0
    %620 = vmatprep.subr.mxu0 0.0
    %621 = vmatpush1.msra.mxu0 0.0
    %622 = vmatprep.subr.mxu0 0.0
    %623 = vmatpush1.msra.mxu0 0.0
    %624 = vmatprep.subr.mxu0 0.0
    %625 = vmatpush1.msra.mxu0 0.0
    %626 = vmatprep.subr.mxu0 0.0
    %627 = vmatpush1.msra.mxu0 0.0
    %628 = vmatprep.subr.mxu0 0.0
    %629 = vmatpush1.msra.mxu0 0.0
    %630 = vmatprep.subr.mxu0 0.0
    %631 = vmatpush1.msra.mxu0 0.0
    %632 = vmatprep.subr.mxu0 0.0
    %633 = vmatpush1.msra.mxu0 0.0
    %634 = vmatprep.subr.mxu0 0.0
    %635 = vmatpush1.msra.mxu0 0.0
    %636 = vmatprep.subr.mxu0 0.0
    %637 = vmatpush1.msra.mxu0 0.0
    %638 = vmatprep.mubr.f32.mxu0 0.0
    %639 = vmatmul.mubr.f32.gmra.mrb[0].mxu0 %v572
    %v640 = vpop.f32.mrb[0].mxu0
    %v641 = vadd.f32 0.0, %v640
    %v642 = vpop.f32.mrb[0].mxu0
    %643 = vdwg.mxu0
    %v645 = vrot.slane %v641, 2
    %v647 = vadd.f32 %v245, %v645
    %v648 = vmul.f32 %v647, %v262
    %v649 = vtanh.pop %v648
    %v650 = vmul.f32 %v649, 0.5
    %v651 = vadd.f32 %v650, 0.5
    %v652 = vsel %vm261, %v649, %v651
    %v654 = vrot.slane %v561, 6
    %v656 = vmul.f32 %v652, %v654
    %658 = vrot.lane.b32.xlu0 %v652, 64
    %v659 = vpop.permute.xlu0 %658
    %v661 = vmul.f32 %v652, %v659
    %663 = vrot.lane.b32.xlu0 %v661, 32
    %v664 = vpop.permute.xlu0 %663
    %v666 = vadd.f32 %v656, %v664
    %v667 = vtanh.pop %v666
    %669 = vrot.lane.b32.xlu0 %v667, 64
    %v670 = vpop.permute.xlu0 %669
    %v672 = vmul.f32 %v652, %v670
    %v674 = vrot.slane %v672, 6
    %675 = vrot.lane.b32.xlu0 %v674, 32
    %v676 = vpop.permute.xlu0 %675
    %v677 = vsel %vm171, %v676, 0
    %679 = vmatprep.subr.mxu0 0.0
    %680 = vmatpush1.msra.mxu0 %v253
    %681 = vmatprep.subr.mxu0 0.0
    %682 = vmatpush1.msra.mxu0 %v254
    %683 = vmatprep.subr.mxu0 0.0
    %684 = vmatpush1.msra.mxu0 %v255
    %685 = vmatprep.subr.mxu0 0.0
    %686 = vmatpush1.msra.mxu0 %v256
    %687 = vmatprep.subr.mxu0 0.0
    %688 = vmatpush1.msra.mxu0 0.0
    %689 = vmatprep.subr.mxu0 0.0
    %690 = vmatpush1.msra.mxu0 0.0
    %691 = vmatprep.subr.mxu0 0.0
    %692 = vmatpush1.msra.mxu0 0.0
    %693 = vmatprep.subr.mxu0 0.0
    %694 = vmatpush1.msra.mxu0 0.0
    %695 = vmatprep.subr.mxu0 0.0
    %696 = vmatpush1.msra.mxu0 0.0
    %697 = vmatprep.subr.mxu0 0.0
    %698 = vmatpush1.msra.mxu0 0.0
    %699 = vmatprep.subr.mxu0 0.0
    %700 = vmatpush1.msra.mxu0 0.0
    %701 = vmatprep.subr.mxu0 0.0
    %702 = vmatpush1.msra.mxu0 0.0
    %703 = vmatprep.subr.mxu0 0.0
    %704 = vmatpush1.msra.mxu0 0.0
    %705 = vmatprep.subr.mxu0 0.0
    %706 = vmatpush1.msra.mxu0 0.0
    %707 = vmatprep.subr.mxu0 0.0
    %708 = vmatpush1.msra.mxu0 0.0
    %709 = vmatprep.subr.mxu0 0.0
    %710 = vmatpush1.msra.mxu0 0.0
    %711 = vmatprep.subr.mxu0 0.0
    %712 = vmatpush1.msra.mxu0 0.0
    %713 = vmatprep.subr.mxu0 0.0
    %714 = vmatpush1.msra.mxu0 0.0
    %715 = vmatprep.subr.mxu0 0.0
    %716 = vmatpush1.msra.mxu0 0.0
    %717 = vmatprep.subr.mxu0 0.0
    %718 = vmatpush1.msra.mxu0 0.0
    %719 = vmatprep.subr.mxu0 0.0
    %720 = vmatpush1.msra.mxu0 0.0
    %721 = vmatprep.subr.mxu0 0.0
    %722 = vmatpush1.msra.mxu0 0.0
    %723 = vmatprep.subr.mxu0 0.0
    %724 = vmatpush1.msra.mxu0 0.0
    %725 = vmatprep.subr.mxu0 0.0
    %726 = vmatpush1.msra.mxu0 0.0
    %727 = vmatprep.subr.mxu0 0.0
    %728 = vmatpush1.msra.mxu0 0.0
    %729 = vmatprep.subr.mxu0 0.0
    %730 = vmatpush1.msra.mxu0 0.0
    %731 = vmatprep.subr.mxu0 0.0
    %732 = vmatpush1.msra.mxu0 0.0
    %733 = vmatprep.subr.mxu0 0.0
    %734 = vmatpush1.msra.mxu0 0.0
    %735 = vmatprep.subr.mxu0 0.0
    %736 = vmatpush1.msra.mxu0 0.0
    %737 = vmatprep.subr.mxu0 0.0
    %738 = vmatpush1.msra.mxu0 0.0
    %739 = vmatprep.subr.mxu0 0.0
    %740 = vmatpush1.msra.mxu0 0.0
    %741 = vmatprep.subr.mxu0 0.0
    %742 = vmatpush1.msra.mxu0 0.0
    %743 = vmatprep.mubr.f32.mxu0 0.0
    %744 = vmatmul.mubr.f32.gmra.mrb[0].mxu0 %v677
    %v745 = vpop.f32.mrb[0].mxu0
    %v746 = vadd.f32 0.0, %v745
    %v747 = vpop.f32.mrb[0].mxu0
    %748 = vdwg.mxu0
    %v749 = vadd.f32 %v250, %v746
    %v750 = vmul.f32 %v749, %v262
    %v751 = vtanh.pop %v750
    %v752 = vmul.f32 %v751, 0.5
    %v753 = vadd.f32 %v752, 0.5
    %v754 = vsel %vm261, %v751, %v753
    %v756 = vrot.slane %v666, 6
    %v758 = vmul.f32 %v754, %v756
    %760 = vrot.lane.b32.xlu0 %v754, 64
    %v761 = vpop.permute.xlu0 %760
    %v763 = vmul.f32 %v754, %v761
    %765 = vrot.lane.b32.xlu0 %v763, 32
    %v766 = vpop.permute.xlu0 %765
    %v768 = vadd.f32 %v758, %v766
    %v769 = vtanh.pop %v768
    %771 = vrot.lane.b32.xlu0 %v769, 64
    %v772 = vpop.permute.xlu0 %771
    %v774 = vmul.f32 %v754, %v772
    %776 = vrot.lane.b32.xlu0 %v774, 32
    %v777 = vpop.permute.xlu0 %776
    %v778 = vsel %vm171, %v777, 0
    %780 = vmatprep.subr.mxu0 0.0
    %781 = vmatpush1.msra.mxu0 %v253
    %782 = vmatprep.subr.mxu0 0.0
    %783 = vmatpush1.msra.mxu0 %v254
    %784 = vmatprep.subr.mxu0 0.0
    %785 = vmatpush1.msra.mxu0 %v255
    %786 = vmatprep.subr.mxu0 0.0
    %787 = vmatpush1.msra.mxu0 %v256
    %788 = vmatprep.subr.mxu0 0.0
    %789 = vmatpush1.msra.mxu0 0.0
    %790 = vmatprep.subr.mxu0 0.0
    %791 = vmatpush1.msra.mxu0 0.0
    %792 = vmatprep.subr.mxu0 0.0
    %793 = vmatpush1.msra.mxu0 0.0
    %794 = vmatprep.subr.mxu0 0.0
    %795 = vmatpush1.msra.mxu0 0.0
    %796 = vmatprep.subr.mxu0 0.0
    %797 = vmatpush1.msra.mxu0 0.0
    %798 = vmatprep.subr.mxu0 0.0
    %799 = vmatpush1.msra.mxu0 0.0
    %800 = vmatprep.subr.mxu0 0.0
    %801 = vmatpush1.msra.mxu0 0.0
    %802 = vmatprep.subr.mxu0 0.0
    %803 = vmatpush1.msra.mxu0 0.0
    %804 = vmatprep.subr.mxu0 0.0
    %805 = vmatpush1.msra.mxu0 0.0
    %806 = vmatprep.subr.mxu0 0.0
    %807 = vmatpush1.msra.mxu0 0.0
    %808 = vmatprep.subr.mxu0 0.0
    %809 = vmatpush1.msra.mxu0 0.0
    %810 = vmatprep.subr.mxu0 0.0
    %811 = vmatpush1.msra.mxu0 0.0
    %812 = vmatprep.subr.mxu0 0.0
    %813 = vmatpush1.msra.mxu0 0.0
    %814 = vmatprep.subr.mxu0 0.0
    %815 = vmatpush1.msra.mxu0 0.0
    %816 = vmatprep.subr.mxu0 0.0
    %817 = vmatpush1.msra.mxu0 0.0
    %818 = vmatprep.subr.mxu0 0.0
    %819 = vmatpush1.msra.mxu0 0.0
    %820 = vmatprep.subr.mxu0 0.0
    %821 = vmatpush1.msra.mxu0 0.0
    %822 = vmatprep.subr.mxu0 0.0
    %823 = vmatpush1.msra.mxu0 0.0
    %824 = vmatprep.subr.mxu0 0.0
    %825 = vmatpush1.msra.mxu0 0.0
    %826 = vmatprep.subr.mxu0 0.0
    %827 = vmatpush1.msra.mxu0 0.0
    %828 = vmatprep.subr.mxu0 0.0
    %829 = vmatpush1.msra.mxu0 0.0
    %830 = vmatprep.subr.mxu0 0.0
    %831 = vmatpush1.msra.mxu0 0.0
    %832 = vmatprep.subr.mxu0 0.0
    %833 = vmatpush1.msra.mxu0 0.0
    %834 = vmatprep.subr.mxu0 0.0
    %835 = vmatpush1.msra.mxu0 0.0
    %836 = vmatprep.subr.mxu0 0.0
    %837 = vmatpush1.msra.mxu0 0.0
    %838 = vmatprep.subr.mxu0 0.0
    %839 = vmatpush1.msra.mxu0 0.0
    %840 = vmatprep.subr.mxu0 0.0
    %841 = vmatpush1.msra.mxu0 0.0
    %842 = vmatprep.subr.mxu0 0.0
    %843 = vmatpush1.msra.mxu0 0.0
    %844 = vmatprep.mubr.f32.mxu0 0.0
    %845 = vmatmul.mubr.f32.gmra.mrb[0].mxu0 %v778
    %v846 = vpop.f32.mrb[0].mxu0
    %v847 = vadd.f32 0.0, %v846
    %v848 = vpop.f32.mrb[0].mxu0
    %849 = vdwg.mxu0
    %v851 = vrot.slane %v847, 6
    %v853 = vadd.f32 %v250, %v851
    %v854 = vmul.f32 %v853, %v262
    %v855 = vtanh.pop %v854
    %v856 = vmul.f32 %v855, 0.5
    %v857 = vadd.f32 %v856, 0.5
    %v858 = vsel %vm261, %v855, %v857
    %v860 = vrot.slane %v768, 6
    %v862 = vmul.f32 %v858, %v860
    %864 = vrot.lane.b32.xlu0 %v858, 64
    %v865 = vpop.permute.xlu0 %864
    %v867 = vmul.f32 %v858, %v865
    %869 = vrot.lane.b32.xlu0 %v867, 32
    %v870 = vpop.permute.xlu0 %869
    %v872 = vadd.f32 %v862, %v870
    %v873 = vtanh.pop %v872
    %875 = vrot.lane.b32.xlu0 %v873, 64
    %v876 = vpop.permute.xlu0 %875
    %v878 = vmul.f32 %v858, %v876
    %v880 = vrot.slane %v878, 2
    %881 = vrot.lane.b32.xlu0 %v880, 32
    %v882 = vpop.permute.xlu0 %881
    %v883 = vsel %vm171, %v882, 0
    %885 = vmatprep.subr.mxu0 0.0
    %886 = vmatpush1.msra.mxu0 %v253
    %887 = vmatprep.subr.mxu0 0.0
    %888 = vmatpush1.msra.mxu0 %v254
    %889 = vmatprep.subr.mxu0 0.0
    %890 = vmatpush1.msra.mxu0 %v255
    %891 = vmatprep.subr.mxu0 0.0
    %892 = vmatpush1.msra.mxu0 %v256
    %893 = vmatprep.subr.mxu0 0.0
    %894 = vmatpush1.msra.mxu0 0.0
    %895 = vmatprep.subr.mxu0 0.0
    %896 = vmatpush1.msra.mxu0 0.0
    %897 = vmatprep.subr.mxu0 0.0
    %898 = vmatpush1.msra.mxu0 0.0
    %899 = vmatprep.subr.mxu0 0.0
    %900 = vmatpush1.msra.mxu0 0.0
    %901 = vmatprep.subr.mxu0 0.0
    %902 = vmatpush1.msra.mxu0 0.0
    %903 = vmatprep.subr.mxu0 0.0
    %904 = vmatpush1.msra.mxu0 0.0
    %905 = vmatprep.subr.mxu0 0.0
    %906 = vmatpush1.msra.mxu0 0.0
    %907 = vmatprep.subr.mxu0 0.0
    %908 = vmatpush1.msra.mxu0 0.0
    %909 = vmatprep.subr.mxu0 0.0
    %910 = vmatpush1.msra.mxu0 0.0
    %911 = vmatprep.subr.mxu0 0.0
    %912 = vmatpush1.msra.mxu0 0.0
    %913 = vmatprep.subr.mxu0 0.0
    %914 = vmatpush1.msra.mxu0 0.0
    %915 = vmatprep.subr.mxu0 0.0
    %916 = vmatpush1.msra.mxu0 0.0
    %917 = vmatprep.subr.mxu0 0.0
    %918 = vmatpush1.msra.mxu0 0.0
    %919 = vmatprep.subr.mxu0 0.0
    %920 = vmatpush1.msra.mxu0 0.0
    %921 = vmatprep.subr.mxu0 0.0
    %922 = vmatpush1.msra.mxu0 0.0
    %923 = vmatprep.subr.mxu0 0.0
    %924 = vmatpush1.msra.mxu0 0.0
    %925 = vmatprep.subr.mxu0 0.0
    %926 = vmatpush1.msra.mxu0 0.0
    %927 = vmatprep.subr.mxu0 0.0
    %928 = vmatpush1.msra.mxu0 0.0
    %929 = vmatprep.subr.mxu0 0.0
    %930 = vmatpush1.msra.mxu0 0.0
    %931 = vmatprep.subr.mxu0 0.0
    %932 = vmatpush1.msra.mxu0 0.0
    %933 = vmatprep.subr.mxu0 0.0
    %934 = vmatpush1.msra.mxu0 0.0
    %935 = vmatprep.subr.mxu0 0.0
    %936 = vmatpush1.msra.mxu0 0.0
    %937 = vmatprep.subr.mxu0 0.0
    %938 = vmatpush1.msra.mxu0 0.0
    %939 = vmatprep.subr.mxu0 0.0
    %940 = vmatpush1.msra.mxu0 0.0
    %941 = vmatprep.subr.mxu0 0.0
    %942 = vmatpush1.msra.mxu0 0.0
    %943 = vmatprep.subr.mxu0 0.0
    %944 = vmatpush1.msra.mxu0 0.0
    %945 = vmatprep.subr.mxu0 0.0
    %946 = vmatpush1.msra.mxu0 0.0
    %947 = vmatprep.subr.mxu0 0.0
    %948 = vmatpush1.msra.mxu0 0.0
    %949 = vmatprep.mubr.f32.mxu0 0.0
    %950 = vmatmul.mubr.f32.gmra.mrb[0].mxu0 %v883
    %v951 = vpop.f32.mrb[0].mxu0
    %v952 = vadd.f32 0.0, %v951
    %v953 = vpop.f32.mrb[0].mxu0
    %954 = vdwg.mxu0
    %v956 = vrot.slane %v952, 4
    %v958 = vadd.f32 %v250, %v956
    %v959 = vmul.f32 %v958, %v262
    %v960 = vtanh.pop %v959
    %v961 = vmul.f32 %v960, 0.5
    %v962 = vadd.f32 %v961, 0.5
    %v963 = vsel %vm261, %v960, %v962
    %v965 = vrot.slane %v872, 6
    %v967 = vmul.f32 %v963, %v965
    %969 = vrot.lane.b32.xlu0 %v963, 64
    %v970 = vpop.permute.xlu0 %969
    %v972 = vmul.f32 %v963, %v970
    %974 = vrot.lane.b32.xlu0 %v972, 32
    %v975 = vpop.permute.xlu0 %974
    %v977 = vadd.f32 %v967, %v975
    %v978 = vtanh.pop %v977
    %980 = vrot.lane.b32.xlu0 %v978, 64
    %v981 = vpop.permute.xlu0 %980
    %v983 = vmul.f32 %v963, %v981
    %v985 = vrot.slane %v983, 4
    %986 = vrot.lane.b32.xlu0 %v985, 32
    %v987 = vpop.permute.xlu0 %986
    %v988 = vsel %vm171, %v987, 0
    %990 = vmatprep.subr.mxu0 0.0
    %991 = vmatpush1.msra.mxu0 %v253
    %992 = vmatprep.subr.mxu0 0.0
    %993 = vmatpush1.msra.mxu0 %v254
    %994 = vmatprep.subr.mxu0 0.0
    %995 = vmatpush1.msra.mxu0 %v255
    %996 = vmatprep.subr.mxu0 0.0
    %997 = vmatpush1.msra.mxu0 %v256
    %998 = vmatprep.subr.mxu0 0.0
    %999 = vmatpush1.msra.mxu0 0.0
    %1000 = vmatprep.subr.mxu0 0.0
    %1001 = vmatpush1.msra.mxu0 0.0
    %1002 = vmatprep.subr.mxu0 0.0
    %1003 = vmatpush1.msra.mxu0 0.0
    %1004 = vmatprep.subr.mxu0 0.0
    %1005 = vmatpush1.msra.mxu0 0.0
    %1006 = vmatprep.subr.mxu0 0.0
    %1007 = vmatpush1.msra.mxu0 0.0
    %1008 = vmatprep.subr.mxu0 0.0
    %1009 = vmatpush1.msra.mxu0 0.0
    %1010 = vmatprep.subr.mxu0 0.0
    %1011 = vmatpush1.msra.mxu0 0.0
    %1012 = vmatprep.subr.mxu0 0.0
    %1013 = vmatpush1.msra.mxu0 0.0
    %1014 = vmatprep.subr.mxu0 0.0
    %1015 = vmatpush1.msra.mxu0 0.0
    %1016 = vmatprep.subr.mxu0 0.0
    %1017 = vmatpush1.msra.mxu0 0.0
    %1018 = vmatprep.subr.mxu0 0.0
    %1019 = vmatpush1.msra.mxu0 0.0
    %1020 = vmatprep.subr.mxu0 0.0
    %1021 = vmatpush1.msra.mxu0 0.0
    %1022 = vmatprep.subr.mxu0 0.0
    %1023 = vmatpush1.msra.mxu0 0.0
    %1024 = vmatprep.subr.mxu0 0.0
    %1025 = vmatpush1.msra.mxu0 0.0
    %1026 = vmatprep.subr.mxu0 0.0
    %1027 = vmatpush1.msra.mxu0 0.0
    %1028 = vmatprep.subr.mxu0 0.0
    %1029 = vmatpush1.msra.mxu0 0.0
    %1030 = vmatprep.subr.mxu0 0.0
    %1031 = vmatpush1.msra.mxu0 0.0
    %1032 = vmatprep.subr.mxu0 0.0
    %1033 = vmatpush1.msra.mxu0 0.0
    %1034 = vmatprep.subr.mxu0 0.0
    %1035 = vmatpush1.msra.mxu0 0.0
    %1036 = vmatprep.subr.mxu0 0.0
    %1037 = vmatpush1.msra.mxu0 0.0
    %1038 = vmatprep.subr.mxu0 0.0
    %1039 = vmatpush1.msra.mxu0 0.0
    %1040 = vmatprep.subr.mxu0 0.0
    %1041 = vmatpush1.msra.mxu0 0.0
    %1042 = vmatprep.subr.mxu0 0.0
    %1043 = vmatpush1.msra.mxu0 0.0
    %1044 = vmatprep.subr.mxu0 0.0
    %1045 = vmatpush1.msra.mxu0 0.0
    %1046 = vmatprep.subr.mxu0 0.0
    %1047 = vmatpush1.msra.mxu0 0.0
    %1048 = vmatprep.subr.mxu0 0.0
    %1049 = vmatpush1.msra.mxu0 0.0
    %1050 = vmatprep.subr.mxu0 0.0
    %1051 = vmatpush1.msra.mxu0 0.0
    %1052 = vmatprep.subr.mxu0 0.0
    %1053 = vmatpush1.msra.mxu0 0.0
    %1054 = vmatprep.mubr.f32.mxu0 0.0
    %1055 = vmatmul.mubr.f32.gmra.mrb[0].mxu0 %v988
    %v1056 = vpop.f32.mrb[0].mxu0
    %v1057 = vadd.f32 0.0, %v1056
    %v1058 = vpop.f32.mrb[0].mxu0
    %1059 = vdwg.mxu0
    %v1061 = vrot.slane %v1057, 2
    %v1063 = vadd.f32 %v250, %v1061
    %v1064 = vmul.f32 %v1063, %v262
    %v1065 = vtanh.pop %v1064
    %v1066 = vmul.f32 %v1065, 0.5
    %v1067 = vadd.f32 %v1066, 0.5
    %v1068 = vsel %vm261, %v1065, %v1067
    %v1070 = vrot.slane %v977, 6
    %v1072 = vmul.f32 %v1068, %v1070
    %1074 = vrot.lane.b32.xlu0 %v1068, 64
    %v1075 = vpop.permute.xlu0 %1074
    %v1077 = vmul.f32 %v1068, %v1075
    %1079 = vrot.lane.b32.xlu0 %v1077, 32
    %v1080 = vpop.permute.xlu0 %1079
    %v1082 = vadd.f32 %v1072, %v1080
    %v1083 = vtanh.pop %v1082
    %1085 = vrot.lane.b32.xlu0 %v1083, 64
    %v1086 = vpop.permute.xlu0 %1085
    %v1088 = vmul.f32 %v1068, %v1086
    %v1089 = vld [vmem:[#allocation11] sm:$0xff]
    %v1090 = vld [vmem:[#allocation11 + $0x8] sm:$0xff]
    %v1091 = vld [vmem:[#allocation11 + $0x10] sm:$0xff]
    %v1092 = vld [vmem:[#allocation11 + $0x18] sm:$0xff]
    %v1093 = vld [vmem:[%s6] sm:$0x1]
    %v1095 = vlaneseq
    %v1096 = vshrl.u32 %v1095, 7
    %v1097 = vsub.s32 0, %v1096
    %v1098 = vrot.slane %v1093, %v1097
    %v1101 = vrot.slane %v1088, 6
    %1102 = vrot.lane.b32.xlu0 %v1101, 32
    %v1103 = vpop.permute.xlu0 %1102
    %v1104 = vsel %vm171, %v1103, 0
    %1106 = vmatprep.subr.mxu0 0.0
    %1107 = vmatpush1.msra.mxu0 %v1089
    %1108 = vmatprep.subr.mxu0 0.0
    %1109 = vmatpush1.msra.mxu0 %v1090
    %1110 = vmatprep.subr.mxu0 0.0
    %1111 = vmatpush1.msra.mxu0 %v1091
    %1112 = vmatprep.subr.mxu0 0.0
    %1113 = vmatpush1.msra.mxu0 %v1092
    %1114 = vmatprep.subr.mxu0 0.0
    %1115 = vmatpush1.msra.mxu0 0.0
    %1116 = vmatprep.subr.mxu0 0.0
    %1117 = vmatpush1.msra.mxu0 0.0
    %1118 = vmatprep.subr.mxu0 0.0
    %1119 = vmatpush1.msra.mxu0 0.0
    %1120 = vmatprep.subr.mxu0 0.0
    %1121 = vmatpush1.msra.mxu0 0.0
    %1122 = vmatprep.subr.mxu0 0.0
    %1123 = vmatpush1.msra.mxu0 0.0
    %1124 = vmatprep.subr.mxu0 0.0
    %1125 = vmatpush1.msra.mxu0 0.0
    %1126 = vmatprep.subr.mxu0 0.0
    %1127 = vmatpush1.msra.mxu0 0.0
    %1128 = vmatprep.subr.mxu0 0.0
    %1129 = vmatpush1.msra.mxu0 0.0
    %1130 = vmatprep.subr.mxu0 0.0
    %1131 = vmatpush1.msra.mxu0 0.0
    %1132 = vmatprep.subr.mxu0 0.0
    %1133 = vmatpush1.msra.mxu0 0.0
    %1134 = vmatprep.subr.mxu0 0.0
    %1135 = vmatpush1.msra.mxu0 0.0
    %1136 = vmatprep.subr.mxu0 0.0
    %1137 = vmatpush1.msra.mxu0 0.0
    %1138 = vmatprep.subr.mxu0 0.0
    %1139 = vmatpush1.msra.mxu0 0.0
    %1140 = vmatprep.subr.mxu0 0.0
    %1141 = vmatpush1.msra.mxu0 0.0
    %1142 = vmatprep.subr.mxu0 0.0
    %1143 = vmatpush1.msra.mxu0 0.0
    %1144 = vmatprep.subr.mxu0 0.0
    %1145 = vmatpush1.msra.mxu0 0.0
    %1146 = vmatprep.subr.mxu0 0.0
    %1147 = vmatpush1.msra.mxu0 0.0
    %1148 = vmatprep.subr.mxu0 0.0
    %1149 = vmatpush1.msra.mxu0 0.0
    %1150 = vmatprep.subr.mxu0 0.0
    %1151 = vmatpush1.msra.mxu0 0.0
    %1152 = vmatprep.subr.mxu0 0.0
    %1153 = vmatpush1.msra.mxu0 0.0
    %1154 = vmatprep.subr.mxu0 0.0
    %1155 = vmatpush1.msra.mxu0 0.0
    %1156 = vmatprep.subr.mxu0 0.0
    %1157 = vmatpush1.msra.mxu0 0.0
    %1158 = vmatprep.subr.mxu0 0.0
    %1159 = vmatpush1.msra.mxu0 0.0
    %1160 = vmatprep.subr.mxu0 0.0
    %1161 = vmatpush1.msra.mxu0 0.0
    %1162 = vmatprep.subr.mxu0 0.0
    %1163 = vmatpush1.msra.mxu0 0.0
    %1164 = vmatprep.subr.mxu0 0.0
    %1165 = vmatpush1.msra.mxu0 0.0
    %1166 = vmatprep.subr.mxu0 0.0
    %1167 = vmatpush1.msra.mxu0 0.0
    %1168 = vmatprep.subr.mxu0 0.0
    %1169 = vmatpush1.msra.mxu0 0.0
    %1170 = vmatprep.mubr.f32.mxu0 0.0
    %1171 = vmatmul.mubr.f32.gmra.mrb[0].mxu0 %v1104
    %v1172 = vpop.f32.mrb[0].mxu0
    %v1173 = vadd.f32 %v1098, %v1172
    %v1174 = vpop.f32.mrb[0].mxu0
    %1175 = vdwg.mxu0
    %1176 = vst [vmem:[#allocation13] sm:$0x3] %v1173
    // Predicated region
    $region50: #{lstm1_forward.1} parent=1 // pred_check
      _
    $region51: #{lstm1_forward.1} parent=1 // pred_check_branch
      %1178 = sbr.rel (0) target = $region53
    $region52: #{lstm1_forward.1} parent=1 // pred_region
      %s1180 = ssub.s32 32, 32
      %1181 = vsyncadd [#allocation5], %s1180
      %s1183 = sshll.u32 [#allocation13], 4
      %s1184 = int_to_ptr.vmem [resolvable:$true] %s1183
      %1186 = dma.vmem_to_hbm [thread:$0]  %s1184, 32, %s7, [#allocation5]
    $region53: #{lstm1_forward.1} parent=1 // pred_fallthru
      _
    // Predicated region
    $region54: #{lstm1_forward.1} parent=1 // pred_check
      _
    $region55: #{lstm1_forward.1} parent=1 // pred_check_branch
      %1188 = sbr.rel (0) target = $region57
    $region56: #{lstm1_forward.1} parent=1 // pred_region
      %1189 = dma.done [#allocation5], 32
    $region57: #{lstm1_forward.1} parent=1 // pred_fallthru
      _
    %1190 = vsyncpa [#allocation4], 1
    %1191 = vsyncpa [#allocation9], 1
    %1192 = vsyncpa [#allocation12], 1
    %1193 = vsyncpa [#allocation5], 1
    %1194 = vsyncpa [#allocation6], 1

</llo_original>
